<compile_context>
chip_gen: v5e
topology: v5e:2x2
jax: 0.10.0
libtpu: 0.0.40
codegen_flags: <defaults>
</compile_context>

<pallas_src>
import jax
import jax.numpy as jnp
from jax.experimental import pallas as pl
from jax.experimental.pallas import tpu as pltpu

INPUT_SIZE = 5      # len(feature_cols)
HIDDEN_SIZE = 64
NUM_LAYERS = 2
OUTPUT_SIZE = 1


def make_lstm_kernel(T, B):
    H = HIDDEN_SIZE

    def kernel(x_ref, wih0_ref, whh0_ref, b0_ref, w1_ref, b1_ref,
               wfc_ref, bfc_ref, out_ref):
        """Whole forward pass (2-layer LSTM recurrence + FC) in one kernel.

        x_ref: (T*B, I) time-major rows (row t*B + b).
        wih0:  (I, 4H)   whh0: (H, 4H)   b0: (1, 4H)        -- layer 0
        w1:    (2H, 4H) = [wih1.T ; whh1.T]   b1: (1, 4H)   -- layer 1 (fused)
        wfc:   (H, O)    bfc: (1, O)          out: (B, O)
        Gate column order everywhere: (i, f, o, g).
        """
        # Hoisted layer-0 input projection: one (T*B, I) x (I, 4H) matmul,
        # bias b0 folded in here (off the serial critical path).
        xproj = (jnp.dot(x_ref[...], wih0_ref[...],
                         preferred_element_type=jnp.float32)
                 + b0_ref[...])                                 # (T*B, 4H)

        # Hoist weight loads and the bias broadcast out of the unrolled loop
        # (JAX does not CSE broadcast_in_dim).
        whh0 = whh0_ref[...]                                    # (H, 4H)
        w1 = w1_ref[...]                                        # (2H, 4H)
        b1 = jnp.broadcast_to(b1_ref[...], (B, 4 * H))

        def gates_to_hc(gates, c):
            # columns: [i | f | o] -> one sigmoid slab, [g] -> tanh
            sig = jax.nn.sigmoid(gates[:, :3 * H])
            g = jnp.tanh(gates[:, 3 * H:])
            i = sig[:, :H]
            f = sig[:, H:2 * H]
            o = sig[:, 2 * H:3 * H]
            c_new = f * c + i * g
            h_new = o * jnp.tanh(c_new)
            return h_new, c_new

        zeros = jnp.zeros((B, H), jnp.float32)
        h0, c0, h1, c1 = zeros, zeros, zeros, zeros

        # TODO(synk): optional further win — wavefront-pipeline the two layers and
        # pack both layers' gate pre-activations into full (B, 128) vregs.
        for t in range(T):                                      # static unroll
            # Layer 0: only the recurrent matmul remains on the per-step path.
            g0 = (jnp.dot(h0, whh0, preferred_element_type=jnp.float32)
                  + xproj[t * B:(t + 1) * B, :])
            h0, c0 = gates_to_hc(g0, c0)
            # Layer 1: fused x/h matmul with concatenated weights (K = 2H = 128).
            g1 = (jnp.dot(jnp.concatenate([h0, h1], axis=1), w1,
                          preferred_element_type=jnp.float32)
                  + b1)
            h1, c1 = gates_to_hc(g1, c1)

        # FC head on the last timestep's top-layer hidden state (single store).
        out_ref[...] = (jnp.dot(h1, wfc_ref[...],
                                preferred_element_type=jnp.float32)
                        + bfc_ref[...])

    return kernel


def lstm_model_forward(x, kernel_params):
    """x: (B, T, I) float32, batch_first like the PyTorch module."""
    B, T, I = x.shape
    # time-major, flattened to (T*B, I) so the hoisted projection is one matmul
    x_flat = jnp.transpose(x, (1, 0, 2)).reshape(T * B, I)
    vmem = pl.BlockSpec(memory_space=pltpu.MemorySpace.VMEM)
    out = pl.pallas_call(
        make_lstm_kernel(T, B),
        out_shape=jax.ShapeDtypeStruct((B, OUTPUT_SIZE), jnp.float32),
        in_specs=[vmem] * 8,
        out_specs=vmem,
    )(x_flat, *kernel_params)
    return out


def _reorder_gates_T(w):
    """PyTorch (4H, K) gate-major (i,f,g,o) -> (K, 4H) with columns (i,f,o,g)."""
    i, f, g, o = jnp.split(w, 4, axis=0)
    return jnp.concatenate([i, f, o, g], axis=0).T


def _reorder_bias(b):
    """(4H,) in (i,f,g,o) -> (1, 4H) in (i,f,o,g)."""
    i, f, g, o = jnp.split(b, 4)
    return jnp.concatenate([i, f, o, g])[None, :]


def pack_kernel_params(wih0, whh0, bih0, bhh0, wih1, whh1, bih1, bhh1, wfc, bfc):
    """PyTorch-shaped params -> kernel layout (transposed, gate-reordered, fused)."""
    return (
        _reorder_gates_T(wih0),                      # (I, 4H)
        _reorder_gates_T(whh0),                      # (H, 4H)
        _reorder_bias(bih0 + bhh0),                  # (1, 4H)
        jnp.concatenate([_reorder_gates_T(wih1),
                         _reorder_gates_T(whh1)], axis=0),   # (2H, 4H)
        _reorder_bias(bih1 + bhh1),                  # (1, 4H)
        wfc.T,                                       # (H, O)
        bfc[None, :],                                # (1, O)
    )


def reference_forward(x, raw_params):
    """Pure-JAX replica of PyTorch nn.LSTM(num_layers=2) + nn.Linear."""
    (wih0, whh0, bih0, bhh0, wih1, whh1, bih1, bhh1, wfc, bfc) = raw_params
    B, T, _ = x.shape
    H = HIDDEN_SIZE

    def cell(x_t, h, c, wih, whh, bih, bhh):
        gates = x_t @ wih.T + bih + h @ whh.T + bhh
        i, f, g, o = jnp.split(gates, 4, axis=-1)
        i, f, o = jax.nn.sigmoid(i), jax.nn.sigmoid(f), jax.nn.sigmoid(o)
        g = jnp.tanh(g)
        c = f * c + i * g
        h = o * jnp.tanh(c)
        return h, c

    h0 = c0 = h1 = c1 = jnp.zeros((B, H), jnp.float32)
    for t in range(T):
        h0, c0 = cell(x[:, t, :], h0, c0, wih0, whh0, bih0, bhh0)
        h1, c1 = cell(h0, h1, c1, wih1, whh1, bih1, bhh1)
    return h1 @ wfc.T + bfc


if __name__ == "__main__":
    B, T = 8, 8
    key = jax.random.PRNGKey(0)
    keys = jax.random.split(key, 11)
    k = 1.0 / (HIDDEN_SIZE ** 0.5)  # PyTorch default uniform(-1/sqrt(H), 1/sqrt(H))

    def u(kk, shape):
        return jax.random.uniform(kk, shape, jnp.float32, -k, k)

    # PyTorch-shaped parameters (deterministic synthetic init)
    wih0 = u(keys[0], (4 * HIDDEN_SIZE, INPUT_SIZE))
    whh0 = u(keys[1], (4 * HIDDEN_SIZE, HIDDEN_SIZE))
    bih0 = u(keys[2], (4 * HIDDEN_SIZE,))
    bhh0 = u(keys[3], (4 * HIDDEN_SIZE,))
    wih1 = u(keys[4], (4 * HIDDEN_SIZE, HIDDEN_SIZE))
    whh1 = u(keys[5], (4 * HIDDEN_SIZE, HIDDEN_SIZE))
    bih1 = u(keys[6], (4 * HIDDEN_SIZE,))
    bhh1 = u(keys[7], (4 * HIDDEN_SIZE,))
    wfc = u(keys[8], (OUTPUT_SIZE, HIDDEN_SIZE))
    bfc = u(keys[9], (OUTPUT_SIZE,))

    x = jax.random.normal(keys[10], (B, T, INPUT_SIZE), jnp.float32)

    kernel_params = pack_kernel_params(
        wih0, whh0, bih0, bhh0, wih1, whh1, bih1, bhh1, wfc, bfc)

    out = jax.block_until_ready(lstm_model_forward(x, kernel_params))
    ref = reference_forward(
        x, (wih0, whh0, bih0, bhh0, wih1, whh1, bih1, bhh1, wfc, bfc))

    assert out.shape == (B, OUTPUT_SIZE)
    assert jnp.allclose(out, ref, atol=1e-4, rtol=1e-4), (out, ref)
    print("KERNEL_OK")
</pallas_src>

<mosaic_0001>
module attributes {stable_mosaic.version = 11 : i64} {
  func.func @kernel(%arg0: memref<64x5xf32, #tpu.memory_space<vmem>>, %arg1: memref<5x256xf32, #tpu.memory_space<vmem>>, %arg2: memref<64x256xf32, #tpu.memory_space<vmem>>, %arg3: memref<1x256xf32, #tpu.memory_space<vmem>>, %arg4: memref<128x256xf32, #tpu.memory_space<vmem>>, %arg5: memref<1x256xf32, #tpu.memory_space<vmem>>, %arg6: memref<64x1xf32, #tpu.memory_space<vmem>>, %arg7: memref<1x1xf32, #tpu.memory_space<vmem>>, %arg8: memref<8x1xf32, #tpu.memory_space<vmem>>) attributes {dimension_semantics = [], scalar_prefetch = 0 : i64, scratch_operands = 0 : i64, tpu.core_type = #tpu.core_type<tc>} {
    %c0 = arith.constant 0 : index
    %c0_0 = arith.constant 0 : index
    %0 = vector.load %arg0[%c0, %c0_0] : memref<64x5xf32, #tpu.memory_space<vmem>>, vector<64x5xf32>
    %c0_1 = arith.constant 0 : index
    %c0_2 = arith.constant 0 : index
    %1 = vector.load %arg1[%c0_1, %c0_2] : memref<5x256xf32, #tpu.memory_space<vmem>>, vector<5x256xf32>
    %cst = arith.constant dense<0.000000e+00> : vector<64x256xf32>
    %2 = tpu.matmul %0, %1, %cst {dimension_numbers = #tpu.dot_dimension_numbers<[1], [0], [0], [1], [0, 0, 1, 1], [], []>} : vector<64x5xf32>, vector<5x256xf32>, vector<64x256xf32> -> vector<64x256xf32>
    %c0_3 = arith.constant 0 : index
    %c0_4 = arith.constant 0 : index
    %3 = vector.load %arg3[%c0_3, %c0_4] : memref<1x256xf32, #tpu.memory_space<vmem>>, vector<1x256xf32>
    %4 = vector.broadcast %3 : vector<1x256xf32> to vector<64x256xf32>
    %5 = arith.addf %2, %4 : vector<64x256xf32>
    %c0_5 = arith.constant 0 : index
    %c0_6 = arith.constant 0 : index
    %6 = vector.load %arg2[%c0_5, %c0_6] : memref<64x256xf32, #tpu.memory_space<vmem>>, vector<64x256xf32>
    %c0_7 = arith.constant 0 : index
    %c0_8 = arith.constant 0 : index
    %7 = vector.load %arg4[%c0_7, %c0_8] : memref<128x256xf32, #tpu.memory_space<vmem>>, vector<128x256xf32>
    %c0_9 = arith.constant 0 : index
    %c0_10 = arith.constant 0 : index
    %8 = vector.load %arg5[%c0_9, %c0_10] : memref<1x256xf32, #tpu.memory_space<vmem>>, vector<1x256xf32>
    %9 = vector.shape_cast %8 : vector<1x256xf32> to vector<1x256xf32>
    %10 = vector.broadcast %9 : vector<1x256xf32> to vector<8x256xf32>
    %cst_11 = arith.constant 0.000000e+00 : f32
    %11 = vector.broadcast %cst_11 : f32 to vector<8x64xf32>
    %cst_12 = arith.constant dense<0.000000e+00> : vector<8x256xf32>
    %12 = tpu.matmul %11, %6, %cst_12 {dimension_numbers = #tpu.dot_dimension_numbers<[1], [0], [0], [1], [0, 0, 1, 1], [], []>} : vector<8x64xf32>, vector<64x256xf32>, vector<8x256xf32> -> vector<8x256xf32>
    %13 = vector.extract_strided_slice %5 {offsets = [0, 0], sizes = [8, 256], strides = [1, 1]} : vector<64x256xf32> to vector<8x256xf32>
    %14 = arith.addf %12, %13 : vector<8x256xf32>
    %15 = vector.extract_strided_slice %14 {offsets = [0, 0], sizes = [8, 192], strides = [1, 1]} : vector<8x256xf32> to vector<8x192xf32>
    %16 = arith.negf %15 : vector<8x192xf32>
    %17 = math.exp %16 : vector<8x192xf32>
    %cst_13 = arith.constant 1.000000e+00 : f32
    %18 = vector.broadcast %cst_13 : f32 to vector<8x192xf32>
    %19 = arith.addf %18, %17 : vector<8x192xf32>
    %20 = arith.divf %18, %19 : vector<8x192xf32>
    %21 = vector.extract_strided_slice %14 {offsets = [0, 192], sizes = [8, 64], strides = [1, 1]} : vector<8x256xf32> to vector<8x64xf32>
    %22 = math.tanh %21 : vector<8x64xf32>
    %23 = vector.extract_strided_slice %20 {offsets = [0, 0], sizes = [8, 64], strides = [1, 1]} : vector<8x192xf32> to vector<8x64xf32>
    %24 = vector.extract_strided_slice %20 {offsets = [0, 64], sizes = [8, 64], strides = [1, 1]} : vector<8x192xf32> to vector<8x64xf32>
    %25 = vector.extract_strided_slice %20 {offsets = [0, 128], sizes = [8, 64], strides = [1, 1]} : vector<8x192xf32> to vector<8x64xf32>
    %26 = arith.mulf %24, %11 : vector<8x64xf32>
    %27 = arith.mulf %23, %22 : vector<8x64xf32>
    %28 = arith.addf %26, %27 : vector<8x64xf32>
    %29 = math.tanh %28 : vector<8x64xf32>
    %30 = arith.mulf %25, %29 : vector<8x64xf32>
    %31 = tpu.concatenate %30, %11 in 1 : vector<8x64xf32>, vector<8x64xf32> -> vector<8x128xf32>
    %cst_14 = arith.constant dense<0.000000e+00> : vector<8x256xf32>
    %32 = tpu.matmul %31, %7, %cst_14 {dimension_numbers = #tpu.dot_dimension_numbers<[1], [0], [0], [1], [0, 0, 1, 1], [], []>} : vector<8x128xf32>, vector<128x256xf32>, vector<8x256xf32> -> vector<8x256xf32>
    %33 = arith.addf %32, %10 : vector<8x256xf32>
    %34 = vector.extract_strided_slice %33 {offsets = [0, 0], sizes = [8, 192], strides = [1, 1]} : vector<8x256xf32> to vector<8x192xf32>
    %35 = arith.negf %34 : vector<8x192xf32>
    %36 = math.exp %35 : vector<8x192xf32>
    %cst_15 = arith.constant 1.000000e+00 : f32
    %37 = vector.broadcast %cst_15 : f32 to vector<8x192xf32>
    %38 = arith.addf %37, %36 : vector<8x192xf32>
    %39 = arith.divf %37, %38 : vector<8x192xf32>
    %40 = vector.extract_strided_slice %33 {offsets = [0, 192], sizes = [8, 64], strides = [1, 1]} : vector<8x256xf32> to vector<8x64xf32>
    %41 = math.tanh %40 : vector<8x64xf32>
    %42 = vector.extract_strided_slice %39 {offsets = [0, 0], sizes = [8, 64], strides = [1, 1]} : vector<8x192xf32> to vector<8x64xf32>
    %43 = vector.extract_strided_slice %39 {offsets = [0, 64], sizes = [8, 64], strides = [1, 1]} : vector<8x192xf32> to vector<8x64xf32>
    %44 = vector.extract_strided_slice %39 {offsets = [0, 128], sizes = [8, 64], strides = [1, 1]} : vector<8x192xf32> to vector<8x64xf32>
    %45 = arith.mulf %43, %11 : vector<8x64xf32>
    %46 = arith.mulf %42, %41 : vector<8x64xf32>
    %47 = arith.addf %45, %46 : vector<8x64xf32>
    %48 = math.tanh %47 : vector<8x64xf32>
    %49 = arith.mulf %44, %48 : vector<8x64xf32>
    %cst_16 = arith.constant dense<0.000000e+00> : vector<8x256xf32>
    %50 = tpu.matmul %30, %6, %cst_16 {dimension_numbers = #tpu.dot_dimension_numbers<[1], [0], [0], [1], [0, 0, 1, 1], [], []>} : vector<8x64xf32>, vector<64x256xf32>, vector<8x256xf32> -> vector<8x256xf32>
    %51 = vector.extract_strided_slice %5 {offsets = [8, 0], sizes = [8, 256], strides = [1, 1]} : vector<64x256xf32> to vector<8x256xf32>
    %52 = arith.addf %50, %51 : vector<8x256xf32>
    %53 = vector.extract_strided_slice %52 {offsets = [0, 0], sizes = [8, 192], strides = [1, 1]} : vector<8x256xf32> to vector<8x192xf32>
    %54 = arith.negf %53 : vector<8x192xf32>
    %55 = math.exp %54 : vector<8x192xf32>
    %cst_17 = arith.constant 1.000000e+00 : f32
    %56 = vector.broadcast %cst_17 : f32 to vector<8x192xf32>
    %57 = arith.addf %56, %55 : vector<8x192xf32>
    %58 = arith.divf %56, %57 : vector<8x192xf32>
    %59 = vector.extract_strided_slice %52 {offsets = [0, 192], sizes = [8, 64], strides = [1, 1]} : vector<8x256xf32> to vector<8x64xf32>
    %60 = math.tanh %59 : vector<8x64xf32>
    %61 = vector.extract_strided_slice %58 {offsets = [0, 0], sizes = [8, 64], strides = [1, 1]} : vector<8x192xf32> to vector<8x64xf32>
    %62 = vector.extract_strided_slice %58 {offsets = [0, 64], sizes = [8, 64], strides = [1, 1]} : vector<8x192xf32> to vector<8x64xf32>
    %63 = vector.extract_strided_slice %58 {offsets = [0, 128], sizes = [8, 64], strides = [1, 1]} : vector<8x192xf32> to vector<8x64xf32>
    %64 = arith.mulf %62, %28 : vector<8x64xf32>
    %65 = arith.mulf %61, %60 : vector<8x64xf32>
    %66 = arith.addf %64, %65 : vector<8x64xf32>
    %67 = math.tanh %66 : vector<8x64xf32>
    %68 = arith.mulf %63, %67 : vector<8x64xf32>
    %69 = tpu.concatenate %68, %49 in 1 : vector<8x64xf32>, vector<8x64xf32> -> vector<8x128xf32>
    %cst_18 = arith.constant dense<0.000000e+00> : vector<8x256xf32>
    %70 = tpu.matmul %69, %7, %cst_18 {dimension_numbers = #tpu.dot_dimension_numbers<[1], [0], [0], [1], [0, 0, 1, 1], [], []>} : vector<8x128xf32>, vector<128x256xf32>, vector<8x256xf32> -> vector<8x256xf32>
    %71 = arith.addf %70, %10 : vector<8x256xf32>
    %72 = vector.extract_strided_slice %71 {offsets = [0, 0], sizes = [8, 192], strides = [1, 1]} : vector<8x256xf32> to vector<8x192xf32>
    %73 = arith.negf %72 : vector<8x192xf32>
    %74 = math.exp %73 : vector<8x192xf32>
    %cst_19 = arith.constant 1.000000e+00 : f32
    %75 = vector.broadcast %cst_19 : f32 to vector<8x192xf32>
    %76 = arith.addf %75, %74 : vector<8x192xf32>
    %77 = arith.divf %75, %76 : vector<8x192xf32>
    %78 = vector.extract_strided_slice %71 {offsets = [0, 192], sizes = [8, 64], strides = [1, 1]} : vector<8x256xf32> to vector<8x64xf32>
    %79 = math.tanh %78 : vector<8x64xf32>
    %80 = vector.extract_strided_slice %77 {offsets = [0, 0], sizes = [8, 64], strides = [1, 1]} : vector<8x192xf32> to vector<8x64xf32>
    %81 = vector.extract_strided_slice %77 {offsets = [0, 64], sizes = [8, 64], strides = [1, 1]} : vector<8x192xf32> to vector<8x64xf32>
    %82 = vector.extract_strided_slice %77 {offsets = [0, 128], sizes = [8, 64], strides = [1, 1]} : vector<8x192xf32> to vector<8x64xf32>
    %83 = arith.mulf %81, %47 : vector<8x64xf32>
    %84 = arith.mulf %80, %79 : vector<8x64xf32>
    %85 = arith.addf %83, %84 : vector<8x64xf32>
    %86 = math.tanh %85 : vector<8x64xf32>
    %87 = arith.mulf %82, %86 : vector<8x64xf32>
    %cst_20 = arith.constant dense<0.000000e+00> : vector<8x256xf32>
    %88 = tpu.matmul %68, %6, %cst_20 {dimension_numbers = #tpu.dot_dimension_numbers<[1], [0], [0], [1], [0, 0, 1, 1], [], []>} : vector<8x64xf32>, vector<64x256xf32>, vector<8x256xf32> -> vector<8x256xf32>
    %89 = vector.extract_strided_slice %5 {offsets = [16, 0], sizes = [8, 256], strides = [1, 1]} : vector<64x256xf32> to vector<8x256xf32>
    %90 = arith.addf %88, %89 : vector<8x256xf32>
    %91 = vector.extract_strided_slice %90 {offsets = [0, 0], sizes = [8, 192], strides = [1, 1]} : vector<8x256xf32> to vector<8x192xf32>
    %92 = arith.negf %91 : vector<8x192xf32>
    %93 = math.exp %92 : vector<8x192xf32>
    %cst_21 = arith.constant 1.000000e+00 : f32
    %94 = vector.broadcast %cst_21 : f32 to vector<8x192xf32>
    %95 = arith.addf %94, %93 : vector<8x192xf32>
    %96 = arith.divf %94, %95 : vector<8x192xf32>
    %97 = vector.extract_strided_slice %90 {offsets = [0, 192], sizes = [8, 64], strides = [1, 1]} : vector<8x256xf32> to vector<8x64xf32>
    %98 = math.tanh %97 : vector<8x64xf32>
    %99 = vector.extract_strided_slice %96 {offsets = [0, 0], sizes = [8, 64], strides = [1, 1]} : vector<8x192xf32> to vector<8x64xf32>
    %100 = vector.extract_strided_slice %96 {offsets = [0, 64], sizes = [8, 64], strides = [1, 1]} : vector<8x192xf32> to vector<8x64xf32>
    %101 = vector.extract_strided_slice %96 {offsets = [0, 128], sizes = [8, 64], strides = [1, 1]} : vector<8x192xf32> to vector<8x64xf32>
    %102 = arith.mulf %100, %66 : vector<8x64xf32>
    %103 = arith.mulf %99, %98 : vector<8x64xf32>
    %104 = arith.addf %102, %103 : vector<8x64xf32>
    %105 = math.tanh %104 : vector<8x64xf32>
    %106 = arith.mulf %101, %105 : vector<8x64xf32>
    %107 = tpu.concatenate %106, %87 in 1 : vector<8x64xf32>, vector<8x64xf32> -> vector<8x128xf32>
    %cst_22 = arith.constant dense<0.000000e+00> : vector<8x256xf32>
    %108 = tpu.matmul %107, %7, %cst_22 {dimension_numbers = #tpu.dot_dimension_numbers<[1], [0], [0], [1], [0, 0, 1, 1], [], []>} : vector<8x128xf32>, vector<128x256xf32>, vector<8x256xf32> -> vector<8x256xf32>
    %109 = arith.addf %108, %10 : vector<8x256xf32>
    %110 = vector.extract_strided_slice %109 {offsets = [0, 0], sizes = [8, 192], strides = [1, 1]} : vector<8x256xf32> to vector<8x192xf32>
    %111 = arith.negf %110 : vector<8x192xf32>
    %112 = math.exp %111 : vector<8x192xf32>
    %cst_23 = arith.constant 1.000000e+00 : f32
    %113 = vector.broadcast %cst_23 : f32 to vector<8x192xf32>
    %114 = arith.addf %113, %112 : vector<8x192xf32>
    %115 = arith.divf %113, %114 : vector<8x192xf32>
    %116 = vector.extract_strided_slice %109 {offsets = [0, 192], sizes = [8, 64], strides = [1, 1]} : vector<8x256xf32> to vector<8x64xf32>
    %117 = math.tanh %116 : vector<8x64xf32>
    %118 = vector.extract_strided_slice %115 {offsets = [0, 0], sizes = [8, 64], strides = [1, 1]} : vector<8x192xf32> to vector<8x64xf32>
    %119 = vector.extract_strided_slice %115 {offsets = [0, 64], sizes = [8, 64], strides = [1, 1]} : vector<8x192xf32> to vector<8x64xf32>
    %120 = vector.extract_strided_slice %115 {offsets = [0, 128], sizes = [8, 64], strides = [1, 1]} : vector<8x192xf32> to vector<8x64xf32>
    %121 = arith.mulf %119, %85 : vector<8x64xf32>
    %122 = arith.mulf %118, %117 : vector<8x64xf32>
    %123 = arith.addf %121, %122 : vector<8x64xf32>
    %124 = math.tanh %123 : vector<8x64xf32>
    %125 = arith.mulf %120, %124 : vector<8x64xf32>
    %cst_24 = arith.constant dense<0.000000e+00> : vector<8x256xf32>
    %126 = tpu.matmul %106, %6, %cst_24 {dimension_numbers = #tpu.dot_dimension_numbers<[1], [0], [0], [1], [0, 0, 1, 1], [], []>} : vector<8x64xf32>, vector<64x256xf32>, vector<8x256xf32> -> vector<8x256xf32>
    %127 = vector.extract_strided_slice %5 {offsets = [24, 0], sizes = [8, 256], strides = [1, 1]} : vector<64x256xf32> to vector<8x256xf32>
    %128 = arith.addf %126, %127 : vector<8x256xf32>
    %129 = vector.extract_strided_slice %128 {offsets = [0, 0], sizes = [8, 192], strides = [1, 1]} : vector<8x256xf32> to vector<8x192xf32>
    %130 = arith.negf %129 : vector<8x192xf32>
    %131 = math.exp %130 : vector<8x192xf32>
    %cst_25 = arith.constant 1.000000e+00 : f32
    %132 = vector.broadcast %cst_25 : f32 to vector<8x192xf32>
    %133 = arith.addf %132, %131 : vector<8x192xf32>
    %134 = arith.divf %132, %133 : vector<8x192xf32>
    %135 = vector.extract_strided_slice %128 {offsets = [0, 192], sizes = [8, 64], strides = [1, 1]} : vector<8x256xf32> to vector<8x64xf32>
    %136 = math.tanh %135 : vector<8x64xf32>
    %137 = vector.extract_strided_slice %134 {offsets = [0, 0], sizes = [8, 64], strides = [1, 1]} : vector<8x192xf32> to vector<8x64xf32>
    %138 = vector.extract_strided_slice %134 {offsets = [0, 64], sizes = [8, 64], strides = [1, 1]} : vector<8x192xf32> to vector<8x64xf32>
    %139 = vector.extract_strided_slice %134 {offsets = [0, 128], sizes = [8, 64], strides = [1, 1]} : vector<8x192xf32> to vector<8x64xf32>
    %140 = arith.mulf %138, %104 : vector<8x64xf32>
    %141 = arith.mulf %137, %136 : vector<8x64xf32>
    %142 = arith.addf %140, %141 : vector<8x64xf32>
    %143 = math.tanh %142 : vector<8x64xf32>
    %144 = arith.mulf %139, %143 : vector<8x64xf32>
    %145 = tpu.concatenate %144, %125 in 1 : vector<8x64xf32>, vector<8x64xf32> -> vector<8x128xf32>
    %cst_26 = arith.constant dense<0.000000e+00> : vector<8x256xf32>
    %146 = tpu.matmul %145, %7, %cst_26 {dimension_numbers = #tpu.dot_dimension_numbers<[1], [0], [0], [1], [0, 0, 1, 1], [], []>} : vector<8x128xf32>, vector<128x256xf32>, vector<8x256xf32> -> vector<8x256xf32>
    %147 = arith.addf %146, %10 : vector<8x256xf32>
    %148 = vector.extract_strided_slice %147 {offsets = [0, 0], sizes = [8, 192], strides = [1, 1]} : vector<8x256xf32> to vector<8x192xf32>
    %149 = arith.negf %148 : vector<8x192xf32>
    %150 = math.exp %149 : vector<8x192xf32>
    %cst_27 = arith.constant 1.000000e+00 : f32
    %151 = vector.broadcast %cst_27 : f32 to vector<8x192xf32>
    %152 = arith.addf %151, %150 : vector<8x192xf32>
    %153 = arith.divf %151, %152 : vector<8x192xf32>
    %154 = vector.extract_strided_slice %147 {offsets = [0, 192], sizes = [8, 64], strides = [1, 1]} : vector<8x256xf32> to vector<8x64xf32>
    %155 = math.tanh %154 : vector<8x64xf32>
    %156 = vector.extract_strided_slice %153 {offsets = [0, 0], sizes = [8, 64], strides = [1, 1]} : vector<8x192xf32> to vector<8x64xf32>
    %157 = vector.extract_strided_slice %153 {offsets = [0, 64], sizes = [8, 64], strides = [1, 1]} : vector<8x192xf32> to vector<8x64xf32>
    %158 = vector.extract_strided_slice %153 {offsets = [0, 128], sizes = [8, 64], strides = [1, 1]} : vector<8x192xf32> to vector<8x64xf32>
    %159 = arith.mulf %157, %123 : vector<8x64xf32>
    %160 = arith.mulf %156, %155 : vector<8x64xf32>
    %161 = arith.addf %159, %160 : vector<8x64xf32>
    %162 = math.tanh %161 : vector<8x64xf32>
    %163 = arith.mulf %158, %162 : vector<8x64xf32>
    %cst_28 = arith.constant dense<0.000000e+00> : vector<8x256xf32>
    %164 = tpu.matmul %144, %6, %cst_28 {dimension_numbers = #tpu.dot_dimension_numbers<[1], [0], [0], [1], [0, 0, 1, 1], [], []>} : vector<8x64xf32>, vector<64x256xf32>, vector<8x256xf32> -> vector<8x256xf32>
    %165 = vector.extract_strided_slice %5 {offsets = [32, 0], sizes = [8, 256], strides = [1, 1]} : vector<64x256xf32> to vector<8x256xf32>
    %166 = arith.addf %164, %165 : vector<8x256xf32>
    %167 = vector.extract_strided_slice %166 {offsets = [0, 0], sizes = [8, 192], strides = [1, 1]} : vector<8x256xf32> to vector<8x192xf32>
    %168 = arith.negf %167 : vector<8x192xf32>
    %169 = math.exp %168 : vector<8x192xf32>
    %cst_29 = arith.constant 1.000000e+00 : f32
    %170 = vector.broadcast %cst_29 : f32 to vector<8x192xf32>
    %171 = arith.addf %170, %169 : vector<8x192xf32>
    %172 = arith.divf %170, %171 : vector<8x192xf32>
    %173 = vector.extract_strided_slice %166 {offsets = [0, 192], sizes = [8, 64], strides = [1, 1]} : vector<8x256xf32> to vector<8x64xf32>
    %174 = math.tanh %173 : vector<8x64xf32>
    %175 = vector.extract_strided_slice %172 {offsets = [0, 0], sizes = [8, 64], strides = [1, 1]} : vector<8x192xf32> to vector<8x64xf32>
    %176 = vector.extract_strided_slice %172 {offsets = [0, 64], sizes = [8, 64], strides = [1, 1]} : vector<8x192xf32> to vector<8x64xf32>
    %177 = vector.extract_strided_slice %172 {offsets = [0, 128], sizes = [8, 64], strides = [1, 1]} : vector<8x192xf32> to vector<8x64xf32>
    %178 = arith.mulf %176, %142 : vector<8x64xf32>
    %179 = arith.mulf %175, %174 : vector<8x64xf32>
    %180 = arith.addf %178, %179 : vector<8x64xf32>
    %181 = math.tanh %180 : vector<8x64xf32>
    %182 = arith.mulf %177, %181 : vector<8x64xf32>
    %183 = tpu.concatenate %182, %163 in 1 : vector<8x64xf32>, vector<8x64xf32> -> vector<8x128xf32>
    %cst_30 = arith.constant dense<0.000000e+00> : vector<8x256xf32>
    %184 = tpu.matmul %183, %7, %cst_30 {dimension_numbers = #tpu.dot_dimension_numbers<[1], [0], [0], [1], [0, 0, 1, 1], [], []>} : vector<8x128xf32>, vector<128x256xf32>, vector<8x256xf32> -> vector<8x256xf32>
    %185 = arith.addf %184, %10 : vector<8x256xf32>
    %186 = vector.extract_strided_slice %185 {offsets = [0, 0], sizes = [8, 192], strides = [1, 1]} : vector<8x256xf32> to vector<8x192xf32>
    %187 = arith.negf %186 : vector<8x192xf32>
    %188 = math.exp %187 : vector<8x192xf32>
    %cst_31 = arith.constant 1.000000e+00 : f32
    %189 = vector.broadcast %cst_31 : f32 to vector<8x192xf32>
    %190 = arith.addf %189, %188 : vector<8x192xf32>
    %191 = arith.divf %189, %190 : vector<8x192xf32>
    %192 = vector.extract_strided_slice %185 {offsets = [0, 192], sizes = [8, 64], strides = [1, 1]} : vector<8x256xf32> to vector<8x64xf32>
    %193 = math.tanh %192 : vector<8x64xf32>
    %194 = vector.extract_strided_slice %191 {offsets = [0, 0], sizes = [8, 64], strides = [1, 1]} : vector<8x192xf32> to vector<8x64xf32>
    %195 = vector.extract_strided_slice %191 {offsets = [0, 64], sizes = [8, 64], strides = [1, 1]} : vector<8x192xf32> to vector<8x64xf32>
    %196 = vector.extract_strided_slice %191 {offsets = [0, 128], sizes = [8, 64], strides = [1, 1]} : vector<8x192xf32> to vector<8x64xf32>
    %197 = arith.mulf %195, %161 : vector<8x64xf32>
    %198 = arith.mulf %194, %193 : vector<8x64xf32>
    %199 = arith.addf %197, %198 : vector<8x64xf32>
    %200 = math.tanh %199 : vector<8x64xf32>
    %201 = arith.mulf %196, %200 : vector<8x64xf32>
    %cst_32 = arith.constant dense<0.000000e+00> : vector<8x256xf32>
    %202 = tpu.matmul %182, %6, %cst_32 {dimension_numbers = #tpu.dot_dimension_numbers<[1], [0], [0], [1], [0, 0, 1, 1], [], []>} : vector<8x64xf32>, vector<64x256xf32>, vector<8x256xf32> -> vector<8x256xf32>
    %203 = vector.extract_strided_slice %5 {offsets = [40, 0], sizes = [8, 256], strides = [1, 1]} : vector<64x256xf32> to vector<8x256xf32>
    %204 = arith.addf %202, %203 : vector<8x256xf32>
    %205 = vector.extract_strided_slice %204 {offsets = [0, 0], sizes = [8, 192], strides = [1, 1]} : vector<8x256xf32> to vector<8x192xf32>
    %206 = arith.negf %205 : vector<8x192xf32>
    %207 = math.exp %206 : vector<8x192xf32>
    %cst_33 = arith.constant 1.000000e+00 : f32
    %208 = vector.broadcast %cst_33 : f32 to vector<8x192xf32>
    %209 = arith.addf %208, %207 : vector<8x192xf32>
    %210 = arith.divf %208, %209 : vector<8x192xf32>
    %211 = vector.extract_strided_slice %204 {offsets = [0, 192], sizes = [8, 64], strides = [1, 1]} : vector<8x256xf32> to vector<8x64xf32>
    %212 = math.tanh %211 : vector<8x64xf32>
    %213 = vector.extract_strided_slice %210 {offsets = [0, 0], sizes = [8, 64], strides = [1, 1]} : vector<8x192xf32> to vector<8x64xf32>
    %214 = vector.extract_strided_slice %210 {offsets = [0, 64], sizes = [8, 64], strides = [1, 1]} : vector<8x192xf32> to vector<8x64xf32>
    %215 = vector.extract_strided_slice %210 {offsets = [0, 128], sizes = [8, 64], strides = [1, 1]} : vector<8x192xf32> to vector<8x64xf32>
    %216 = arith.mulf %214, %180 : vector<8x64xf32>
    %217 = arith.mulf %213, %212 : vector<8x64xf32>
    %218 = arith.addf %216, %217 : vector<8x64xf32>
    %219 = math.tanh %218 : vector<8x64xf32>
    %220 = arith.mulf %215, %219 : vector<8x64xf32>
    %221 = tpu.concatenate %220, %201 in 1 : vector<8x64xf32>, vector<8x64xf32> -> vector<8x128xf32>
    %cst_34 = arith.constant dense<0.000000e+00> : vector<8x256xf32>
    %222 = tpu.matmul %221, %7, %cst_34 {dimension_numbers = #tpu.dot_dimension_numbers<[1], [0], [0], [1], [0, 0, 1, 1], [], []>} : vector<8x128xf32>, vector<128x256xf32>, vector<8x256xf32> -> vector<8x256xf32>
    %223 = arith.addf %222, %10 : vector<8x256xf32>
    %224 = vector.extract_strided_slice %223 {offsets = [0, 0], sizes = [8, 192], strides = [1, 1]} : vector<8x256xf32> to vector<8x192xf32>
    %225 = arith.negf %224 : vector<8x192xf32>
    %226 = math.exp %225 : vector<8x192xf32>
    %cst_35 = arith.constant 1.000000e+00 : f32
    %227 = vector.broadcast %cst_35 : f32 to vector<8x192xf32>
    %228 = arith.addf %227, %226 : vector<8x192xf32>
    %229 = arith.divf %227, %228 : vector<8x192xf32>
    %230 = vector.extract_strided_slice %223 {offsets = [0, 192], sizes = [8, 64], strides = [1, 1]} : vector<8x256xf32> to vector<8x64xf32>
    %231 = math.tanh %230 : vector<8x64xf32>
    %232 = vector.extract_strided_slice %229 {offsets = [0, 0], sizes = [8, 64], strides = [1, 1]} : vector<8x192xf32> to vector<8x64xf32>
    %233 = vector.extract_strided_slice %229 {offsets = [0, 64], sizes = [8, 64], strides = [1, 1]} : vector<8x192xf32> to vector<8x64xf32>
    %234 = vector.extract_strided_slice %229 {offsets = [0, 128], sizes = [8, 64], strides = [1, 1]} : vector<8x192xf32> to vector<8x64xf32>
    %235 = arith.mulf %233, %199 : vector<8x64xf32>
    %236 = arith.mulf %232, %231 : vector<8x64xf32>
    %237 = arith.addf %235, %236 : vector<8x64xf32>
    %238 = math.tanh %237 : vector<8x64xf32>
    %239 = arith.mulf %234, %238 : vector<8x64xf32>
    %cst_36 = arith.constant dense<0.000000e+00> : vector<8x256xf32>
    %240 = tpu.matmul %220, %6, %cst_36 {dimension_numbers = #tpu.dot_dimension_numbers<[1], [0], [0], [1], [0, 0, 1, 1], [], []>} : vector<8x64xf32>, vector<64x256xf32>, vector<8x256xf32> -> vector<8x256xf32>
    %241 = vector.extract_strided_slice %5 {offsets = [48, 0], sizes = [8, 256], strides = [1, 1]} : vector<64x256xf32> to vector<8x256xf32>
    %242 = arith.addf %240, %241 : vector<8x256xf32>
    %243 = vector.extract_strided_slice %242 {offsets = [0, 0], sizes = [8, 192], strides = [1, 1]} : vector<8x256xf32> to vector<8x192xf32>
    %244 = arith.negf %243 : vector<8x192xf32>
    %245 = math.exp %244 : vector<8x192xf32>
    %cst_37 = arith.constant 1.000000e+00 : f32
    %246 = vector.broadcast %cst_37 : f32 to vector<8x192xf32>
    %247 = arith.addf %246, %245 : vector<8x192xf32>
    %248 = arith.divf %246, %247 : vector<8x192xf32>
    %249 = vector.extract_strided_slice %242 {offsets = [0, 192], sizes = [8, 64], strides = [1, 1]} : vector<8x256xf32> to vector<8x64xf32>
    %250 = math.tanh %249 : vector<8x64xf32>
    %251 = vector.extract_strided_slice %248 {offsets = [0, 0], sizes = [8, 64], strides = [1, 1]} : vector<8x192xf32> to vector<8x64xf32>
    %252 = vector.extract_strided_slice %248 {offsets = [0, 64], sizes = [8, 64], strides = [1, 1]} : vector<8x192xf32> to vector<8x64xf32>
    %253 = vector.extract_strided_slice %248 {offsets = [0, 128], sizes = [8, 64], strides = [1, 1]} : vector<8x192xf32> to vector<8x64xf32>
    %254 = arith.mulf %252, %218 : vector<8x64xf32>
    %255 = arith.mulf %251, %250 : vector<8x64xf32>
    %256 = arith.addf %254, %255 : vector<8x64xf32>
    %257 = math.tanh %256 : vector<8x64xf32>
    %258 = arith.mulf %253, %257 : vector<8x64xf32>
    %259 = tpu.concatenate %258, %239 in 1 : vector<8x64xf32>, vector<8x64xf32> -> vector<8x128xf32>
    %cst_38 = arith.constant dense<0.000000e+00> : vector<8x256xf32>
    %260 = tpu.matmul %259, %7, %cst_38 {dimension_numbers = #tpu.dot_dimension_numbers<[1], [0], [0], [1], [0, 0, 1, 1], [], []>} : vector<8x128xf32>, vector<128x256xf32>, vector<8x256xf32> -> vector<8x256xf32>
    %261 = arith.addf %260, %10 : vector<8x256xf32>
    %262 = vector.extract_strided_slice %261 {offsets = [0, 0], sizes = [8, 192], strides = [1, 1]} : vector<8x256xf32> to vector<8x192xf32>
    %263 = arith.negf %262 : vector<8x192xf32>
    %264 = math.exp %263 : vector<8x192xf32>
    %cst_39 = arith.constant 1.000000e+00 : f32
    %265 = vector.broadcast %cst_39 : f32 to vector<8x192xf32>
    %266 = arith.addf %265, %264 : vector<8x192xf32>
    %267 = arith.divf %265, %266 : vector<8x192xf32>
    %268 = vector.extract_strided_slice %261 {offsets = [0, 192], sizes = [8, 64], strides = [1, 1]} : vector<8x256xf32> to vector<8x64xf32>
    %269 = math.tanh %268 : vector<8x64xf32>
    %270 = vector.extract_strided_slice %267 {offsets = [0, 0], sizes = [8, 64], strides = [1, 1]} : vector<8x192xf32> to vector<8x64xf32>
    %271 = vector.extract_strided_slice %267 {offsets = [0, 64], sizes = [8, 64], strides = [1, 1]} : vector<8x192xf32> to vector<8x64xf32>
    %272 = vector.extract_strided_slice %267 {offsets = [0, 128], sizes = [8, 64], strides = [1, 1]} : vector<8x192xf32> to vector<8x64xf32>
    %273 = arith.mulf %271, %237 : vector<8x64xf32>
    %274 = arith.mulf %270, %269 : vector<8x64xf32>
    %275 = arith.addf %273, %274 : vector<8x64xf32>
    %276 = math.tanh %275 : vector<8x64xf32>
    %277 = arith.mulf %272, %276 : vector<8x64xf32>
    %cst_40 = arith.constant dense<0.000000e+00> : vector<8x256xf32>
    %278 = tpu.matmul %258, %6, %cst_40 {dimension_numbers = #tpu.dot_dimension_numbers<[1], [0], [0], [1], [0, 0, 1, 1], [], []>} : vector<8x64xf32>, vector<64x256xf32>, vector<8x256xf32> -> vector<8x256xf32>
    %279 = vector.extract_strided_slice %5 {offsets = [56, 0], sizes = [8, 256], strides = [1, 1]} : vector<64x256xf32> to vector<8x256xf32>
    %280 = arith.addf %278, %279 : vector<8x256xf32>
    %281 = vector.extract_strided_slice %280 {offsets = [0, 0], sizes = [8, 192], strides = [1, 1]} : vector<8x256xf32> to vector<8x192xf32>
    %282 = arith.negf %281 : vector<8x192xf32>
    %283 = math.exp %282 : vector<8x192xf32>
    %cst_41 = arith.constant 1.000000e+00 : f32
    %284 = vector.broadcast %cst_41 : f32 to vector<8x192xf32>
    %285 = arith.addf %284, %283 : vector<8x192xf32>
    %286 = arith.divf %284, %285 : vector<8x192xf32>
    %287 = vector.extract_strided_slice %280 {offsets = [0, 192], sizes = [8, 64], strides = [1, 1]} : vector<8x256xf32> to vector<8x64xf32>
    %288 = math.tanh %287 : vector<8x64xf32>
    %289 = vector.extract_strided_slice %286 {offsets = [0, 0], sizes = [8, 64], strides = [1, 1]} : vector<8x192xf32> to vector<8x64xf32>
    %290 = vector.extract_strided_slice %286 {offsets = [0, 64], sizes = [8, 64], strides = [1, 1]} : vector<8x192xf32> to vector<8x64xf32>
    %291 = vector.extract_strided_slice %286 {offsets = [0, 128], sizes = [8, 64], strides = [1, 1]} : vector<8x192xf32> to vector<8x64xf32>
    %292 = arith.mulf %290, %256 : vector<8x64xf32>
    %293 = arith.mulf %289, %288 : vector<8x64xf32>
    %294 = arith.addf %292, %293 : vector<8x64xf32>
    %295 = math.tanh %294 : vector<8x64xf32>
    %296 = arith.mulf %291, %295 : vector<8x64xf32>
    %297 = tpu.concatenate %296, %277 in 1 : vector<8x64xf32>, vector<8x64xf32> -> vector<8x128xf32>
    %cst_42 = arith.constant dense<0.000000e+00> : vector<8x256xf32>
    %298 = tpu.matmul %297, %7, %cst_42 {dimension_numbers = #tpu.dot_dimension_numbers<[1], [0], [0], [1], [0, 0, 1, 1], [], []>} : vector<8x128xf32>, vector<128x256xf32>, vector<8x256xf32> -> vector<8x256xf32>
    %299 = arith.addf %298, %10 : vector<8x256xf32>
    %300 = vector.extract_strided_slice %299 {offsets = [0, 0], sizes = [8, 192], strides = [1, 1]} : vector<8x256xf32> to vector<8x192xf32>
    %301 = arith.negf %300 : vector<8x192xf32>
    %302 = math.exp %301 : vector<8x192xf32>
    %cst_43 = arith.constant 1.000000e+00 : f32
    %303 = vector.broadcast %cst_43 : f32 to vector<8x192xf32>
    %304 = arith.addf %303, %302 : vector<8x192xf32>
    %305 = arith.divf %303, %304 : vector<8x192xf32>
    %306 = vector.extract_strided_slice %299 {offsets = [0, 192], sizes = [8, 64], strides = [1, 1]} : vector<8x256xf32> to vector<8x64xf32>
    %307 = math.tanh %306 : vector<8x64xf32>
    %308 = vector.extract_strided_slice %305 {offsets = [0, 0], sizes = [8, 64], strides = [1, 1]} : vector<8x192xf32> to vector<8x64xf32>
    %309 = vector.extract_strided_slice %305 {offsets = [0, 64], sizes = [8, 64], strides = [1, 1]} : vector<8x192xf32> to vector<8x64xf32>
    %310 = vector.extract_strided_slice %305 {offsets = [0, 128], sizes = [8, 64], strides = [1, 1]} : vector<8x192xf32> to vector<8x64xf32>
    %311 = arith.mulf %309, %275 : vector<8x64xf32>
    %312 = arith.mulf %308, %307 : vector<8x64xf32>
    %313 = arith.addf %311, %312 : vector<8x64xf32>
    %314 = math.tanh %313 : vector<8x64xf32>
    %315 = arith.mulf %310, %314 : vector<8x64xf32>
    %c0_44 = arith.constant 0 : index
    %c0_45 = arith.constant 0 : index
    %316 = vector.load %arg6[%c0_44, %c0_45] : memref<64x1xf32, #tpu.memory_space<vmem>>, vector<64x1xf32>
    %cst_46 = arith.constant dense<0.000000e+00> : vector<8x1xf32>
    %317 = tpu.matmul %315, %316, %cst_46 {dimension_numbers = #tpu.dot_dimension_numbers<[1], [0], [0], [1], [0, 0, 1, 1], [], []>} : vector<8x64xf32>, vector<64x1xf32>, vector<8x1xf32> -> vector<8x1xf32>
    %c0_47 = arith.constant 0 : index
    %c0_48 = arith.constant 0 : index
    %318 = vector.load %arg7[%c0_47, %c0_48] : memref<1x1xf32, #tpu.memory_space<vmem>>, vector<1x1xf32>
    %319 = vector.broadcast %318 : vector<1x1xf32> to vector<8x1xf32>
    %320 = arith.addf %317, %319 : vector<8x1xf32>
    %c0_49 = arith.constant 0 : index
    %c0_50 = arith.constant 0 : index
    %321 = vector.load %arg8[%c0_49, %c0_50] : memref<8x1xf32, #tpu.memory_space<vmem>>, vector<8x1xf32>
    tpu.vector_store %arg8[%c0_49, %c0_50], %320 {strides = array<i32>} : memref<8x1xf32, #tpu.memory_space<vmem>>, vector<8x1xf32>,
    return
  }
}

</mosaic_0001>

<llo_original>
// kernel: tpu_custom_call.1
$region0: #{tpu_custom_call.1}
  #allocation0 [shape = 'u32[]', space=smem, size = 0x4, offset = 0x4, fixed_abs, tag = 'smem constant byte address 0x4 - core index']
  #allocation1 [shape = 'u32[72,128]{1,0:T(1,128)}', space=vmem, size = 0x9000, scoped, tag = 'internal scratch']
  #allocation2 [shape = 'f32[1,1]{1,0:T(1,128)S(1)}', space=vmem, size = 0x200, scoped, tag = 'scoped memory for tpu_custom_call.1']
  %s0 = inlined_call_operand.vmem [shape: f32[64,5], index: 0, kind: input, shape index: {}]
  %s1 = inlined_call_operand.hbm [shape: f32[5,256], index: 1, kind: input, shape index: {}]
  %s2 = inlined_call_operand.vmem [shape: f32[64,256], index: 2, kind: input, shape index: {}]
  %s3 = inlined_call_operand.vmem [shape: f32[1,256], index: 3, kind: input, shape index: {}]
  %s4 = inlined_call_operand.hbm [shape: f32[128,256], index: 4, kind: input, shape index: {}]
  %s5 = inlined_call_operand.vmem [shape: f32[1,256], index: 5, kind: input, shape index: {}]
  %s6 = inlined_call_operand.vmem [shape: f32[64,1], index: 6, kind: input, shape index: {}]
  %s7 = inlined_call_operand.<no memory space> [shape: f32[1,1], index: 7, kind: input, shape index: {}]
  %s8 = inlined_call_operand.vmem [shape: f32[8,1], index: 8, kind: output, shape index: {}]
  %s9 = sld [smem:[#allocation0]]
  $region50: #{tpu_custom_call.1} parent=0
    _
  %s11 = ssub.s32 1, %s9
  %s12 = scalar_select 0, %s11, %s9
  %v13 = vstv %s7
  %14 = vst [vmem:[#allocation2] sm:$0x1] %v13
  $region1: #{tpu_custom_call.1} parent=0
    #allocation3 [shape = 'u8[8192]{0}', space=vmem, size = 0x2000, scoped, tag = 'input window, operand 1, single buffered']
    #allocation4 [shape = 's32[1]{0}', space=sflag, size = 0x4, scoped, tag = 'scoped memory for tpu_custom_call.1']
    #allocation5 [shape = 'u8[131072]{0}', space=vmem, size = 0x20000, scoped, tag = 'input window, operand 4, single buffered']
    #allocation6 [shape = 's32[1]{0}', space=sflag, size = 0x4, scoped, tag = 'scoped memory for tpu_custom_call.1']
    %15 = vsyncpa [#allocation4], 0
    %16 = vsyncpa [#allocation6], 0
    // Predicated region
    $region2: #{tpu_custom_call.1} parent=1 // pred_check
      _
    $region3: #{tpu_custom_call.1} parent=1 // pred_check_branch
      %18 = sbr.rel (0) target = $region5
    $region4: #{tpu_custom_call.1} parent=1 // pred_region
      _
    $region5: #{tpu_custom_call.1} parent=1 // pred_fallthru
      _
    // Predicated region
    $region6: #{tpu_custom_call.1} parent=1 // pred_check
      _
    $region7: #{tpu_custom_call.1} parent=1 // pred_check_branch
      %20 = sbr.rel (0) target = $region9
    $region8: #{tpu_custom_call.1} parent=1 // pred_region
      %22 = vsyncadd [#allocation4], 0
      %s24 = sshll.u32 %s1, 4
      %s25 = int_to_ptr.hbm [resolvable:$true] %s24
      %s26 = sshll.u32 [#allocation3], 4
      %s27 = int_to_ptr.vmem [resolvable:$true] %s26
      %29 = dma.hbm_to_vmem [thread:$0]  %s25, 256, %s27, [#allocation4]
    $region9: #{tpu_custom_call.1} parent=1 // pred_fallthru
      _
    // Predicated region
    $region10: #{tpu_custom_call.1} parent=1 // pred_check
      _
    $region11: #{tpu_custom_call.1} parent=1 // pred_check_branch
      %31 = sbr.rel (0) target = $region13
    $region12: #{tpu_custom_call.1} parent=1 // pred_region
      _
    $region13: #{tpu_custom_call.1} parent=1 // pred_fallthru
      _
    // Predicated region
    $region14: #{tpu_custom_call.1} parent=1 // pred_check
      _
    $region15: #{tpu_custom_call.1} parent=1 // pred_check_branch
      %33 = sbr.rel (0) target = $region17
    $region16: #{tpu_custom_call.1} parent=1 // pred_region
      _
    $region17: #{tpu_custom_call.1} parent=1 // pred_fallthru
      _
    // Predicated region
    $region18: #{tpu_custom_call.1} parent=1 // pred_check
      _
    $region19: #{tpu_custom_call.1} parent=1 // pred_check_branch
      %35 = sbr.rel (0) target = $region21
    $region20: #{tpu_custom_call.1} parent=1 // pred_region
      %37 = vsyncadd [#allocation6], 0
      %s38 = sshll.u32 %s4, 4
      %s39 = int_to_ptr.hbm [resolvable:$true] %s38
      %s40 = sshll.u32 [#allocation5], 4
      %s41 = int_to_ptr.vmem [resolvable:$true] %s40
      %46 = dma.hbm_to_vmem [thread:$0]  %s39, 4096, %s41, [#allocation6], 256, 256, 16
    $region21: #{tpu_custom_call.1} parent=1 // pred_fallthru
      _
    // Predicated region
    $region22: #{tpu_custom_call.1} parent=1 // pred_check
      _
    $region23: #{tpu_custom_call.1} parent=1 // pred_check_branch
      %48 = sbr.rel (0) target = $region25
    $region24: #{tpu_custom_call.1} parent=1 // pred_region
      _
    $region25: #{tpu_custom_call.1} parent=1 // pred_fallthru
      _
    // Predicated region
    $region26: #{tpu_custom_call.1} parent=1 // pred_check
      _
    $region27: #{tpu_custom_call.1} parent=1 // pred_check_branch
      %50 = sbr.rel (0) target = $region29
    $region28: #{tpu_custom_call.1} parent=1 // pred_region
      _
    $region29: #{tpu_custom_call.1} parent=1 // pred_fallthru
      _
    // Predicated region
    $region30: #{tpu_custom_call.1} parent=1 // pred_check
      _
    $region31: #{tpu_custom_call.1} parent=1 // pred_check_branch
      %52 = sbr.rel (0) target = $region33
    $region32: #{tpu_custom_call.1} parent=1 // pred_region
      _
    $region33: #{tpu_custom_call.1} parent=1 // pred_fallthru
      _
    // Predicated region
    $region34: #{tpu_custom_call.1} parent=1 // pred_check
      _
    $region35: #{tpu_custom_call.1} parent=1 // pred_check_branch
      %54 = sbr.rel (0) target = $region37
    $region36: #{tpu_custom_call.1} parent=1 // pred_region
      %56 = dma.done [#allocation4], 256
    $region37: #{tpu_custom_call.1} parent=1 // pred_fallthru
      _
    // Predicated region
    $region38: #{tpu_custom_call.1} parent=1 // pred_check
      _
    $region39: #{tpu_custom_call.1} parent=1 // pred_check_branch
      %58 = sbr.rel (0) target = $region41
    $region40: #{tpu_custom_call.1} parent=1 // pred_region
      %60 = dma.done [#allocation6], 4096
    $region41: #{tpu_custom_call.1} parent=1 // pred_fallthru
      _
    %v61 = vld [vmem:[%s0] sm:$0xff]
    %v62 = vld [vmem:[%s0 + $0x8] sm:$0xff]
    %v63 = vld [vmem:[%s0 + $0x10] sm:$0xff]
    %v64 = vld [vmem:[%s0 + $0x18] sm:$0xff]
    %v65 = vld [vmem:[%s0 + $0x20] sm:$0xff]
    %v66 = vld [vmem:[%s0 + $0x28] sm:$0xff]
    %v67 = vld [vmem:[%s0 + $0x30] sm:$0xff]
    %v68 = vld [vmem:[%s0 + $0x38] sm:$0xff]
    %v69 = vld [vmem:[#allocation3] sm:$0x1f]
    %v70 = vld [vmem:[#allocation3 + $0x8] sm:$0x1f]
    %v71 = vld [vmem:[%s3] sm:$0x3]
    %v73 = vperm.slane %v71, 0
    %v74 = vperm.slane %v71, 1
    %vm77 = vcmask 39936
    %v79 = vsel %vm77, %v61, 0
    %v82 = vsel %vm77, %v62, 0
    %v85 = vsel %vm77, %v63, 0
    %v88 = vsel %vm77, %v64, 0
    %v91 = vsel %vm77, %v65, 0
    %v94 = vsel %vm77, %v66, 0
    %v97 = vsel %vm77, %v67, 0
    %v100 = vsel %vm77, %v68, 0
    %vm102 = vcmask 1044480
    %v104 = vsel %vm102, %v69, 0
    %v107 = vsel %vm102, %v70, 0
    %109 = vmatpush.msra.mxu0 0.0
    %110 = vmatpush.msra.mxu0 0.0
    %111 = vmatpush.msra.mxu0 0.0
    %112 = vmatpush.msra.mxu0 0.0
    %113 = vmatpush.msra.mxu0 0.0
    %114 = vmatpush.msra.mxu0 0.0
    %115 = vmatpush.msra.mxu0 0.0
    %116 = vmatpush.msra.mxu0 0.0
    %117 = vmatpush.msra.mxu0 0.0
    %118 = vmatpush.msra.mxu0 0.0
    %119 = vmatpush.msra.mxu0 0.0
    %120 = vmatpush.msra.mxu0 0.0
    %121 = vmatpush.msra.mxu0 0.0
    %122 = vmatpush.msra.mxu0 0.0
    %123 = vmatpush.msra.mxu0 0.0
    %124 = vmatpush.msra.mxu0 %v104
    %125 = vmatmul.f32.gmra.mxu0 %v79
    %v126 = vpop.f32.mrf.mxu0
    %v127 = vadd.f32 %v73, %v126
    %128 = vmatmul.f32.gmra.mxu0 %v82
    %v129 = vpop.f32.mrf.mxu0
    %v130 = vadd.f32 %v73, %v129
    %131 = vmatmul.f32.gmra.mxu0 %v85
    %v132 = vpop.f32.mrf.mxu0
    %v133 = vadd.f32 %v73, %v132
    %134 = vmatmul.f32.gmra.mxu0 %v88
    %v135 = vpop.f32.mrf.mxu0
    %v136 = vadd.f32 %v73, %v135
    %137 = vmatmul.f32.gmra.mxu0 %v91
    %v138 = vpop.f32.mrf.mxu0
    %v139 = vadd.f32 %v73, %v138
    %140 = vmatmul.f32.gmra.mxu0 %v94
    %v141 = vpop.f32.mrf.mxu0
    %v142 = vadd.f32 %v73, %v141
    %143 = vmatmul.f32.gmra.mxu0 %v97
    %v144 = vpop.f32.mrf.mxu0
    %v145 = vadd.f32 %v73, %v144
    %146 = vmatmul.f32.gmra.mxu0 %v100
    %v147 = vpop.f32.mrf.mxu0
    %v148 = vadd.f32 %v73, %v147
    %149 = vdwg.mxu0
    %150 = vmatpush.msra.mxu0 0.0
    %151 = vmatpush.msra.mxu0 0.0
    %152 = vmatpush.msra.mxu0 0.0
    %153 = vmatpush.msra.mxu0 0.0
    %154 = vmatpush.msra.mxu0 0.0
    %155 = vmatpush.msra.mxu0 0.0
    %156 = vmatpush.msra.mxu0 0.0
    %157 = vmatpush.msra.mxu0 0.0
    %158 = vmatpush.msra.mxu0 0.0
    %159 = vmatpush.msra.mxu0 0.0
    %160 = vmatpush.msra.mxu0 0.0
    %161 = vmatpush.msra.mxu0 0.0
    %162 = vmatpush.msra.mxu0 0.0
    %163 = vmatpush.msra.mxu0 0.0
    %164 = vmatpush.msra.mxu0 0.0
    %165 = vmatpush.msra.mxu0 %v107
    %166 = vmatmul.f32.gmra.mxu0 %v79
    %v167 = vpop.f32.mrf.mxu0
    %v168 = vadd.f32 %v74, %v167
    %169 = vmatmul.f32.gmra.mxu0 %v82
    %v170 = vpop.f32.mrf.mxu0
    %v171 = vadd.f32 %v74, %v170
    %172 = vmatmul.f32.gmra.mxu0 %v85
    %v173 = vpop.f32.mrf.mxu0
    %v174 = vadd.f32 %v74, %v173
    %175 = vmatmul.f32.gmra.mxu0 %v88
    %v176 = vpop.f32.mrf.mxu0
    %v177 = vadd.f32 %v74, %v176
    %178 = vmatmul.f32.gmra.mxu0 %v91
    %v179 = vpop.f32.mrf.mxu0
    %v180 = vadd.f32 %v74, %v179
    %181 = vmatmul.f32.gmra.mxu0 %v94
    %v182 = vpop.f32.mrf.mxu0
    %v183 = vadd.f32 %v74, %v182
    %184 = vmatmul.f32.gmra.mxu0 %v97
    %v185 = vpop.f32.mrf.mxu0
    %v186 = vadd.f32 %v74, %v185
    %187 = vmatmul.f32.gmra.mxu0 %v100
    %v188 = vpop.f32.mrf.mxu0
    %v189 = vadd.f32 %v74, %v188
    %190 = vdwg.mxu0
    %v191 = vld [vmem:[%s2] sm:$0xff]
    %v192 = vld [vmem:[%s2 + $0x8] sm:$0xff]
    %v193 = vld [vmem:[%s2 + $0x10] sm:$0xff]
    %v194 = vld [vmem:[%s2 + $0x18] sm:$0xff]
    %v195 = vld [vmem:[%s2 + $0x20] sm:$0xff]
    %v196 = vld [vmem:[%s2 + $0x28] sm:$0xff]
    %v197 = vld [vmem:[%s2 + $0x30] sm:$0xff]
    %v198 = vld [vmem:[%s2 + $0x38] sm:$0xff]
    %v199 = vld [vmem:[%s2 + $0x40] sm:$0xff]
    %v200 = vld [vmem:[%s2 + $0x48] sm:$0xff]
    %v201 = vld [vmem:[%s2 + $0x50] sm:$0xff]
    %v202 = vld [vmem:[%s2 + $0x58] sm:$0xff]
    %v203 = vld [vmem:[%s2 + $0x60] sm:$0xff]
    %v204 = vld [vmem:[%s2 + $0x68] sm:$0xff]
    %v205 = vld [vmem:[%s2 + $0x70] sm:$0xff]
    %v206 = vld [vmem:[%s2 + $0x78] sm:$0xff]
    %v207 = vld [vmem:[#allocation5] sm:$0xff]
    %v208 = vld [vmem:[#allocation5 + $0x8] sm:$0xff]
    %v209 = vld [vmem:[#allocation5 + $0x10] sm:$0xff]
    %v210 = vld [vmem:[#allocation5 + $0x18] sm:$0xff]
    %v211 = vld [vmem:[#allocation5 + $0x20] sm:$0xff]
    %v212 = vld [vmem:[#allocation5 + $0x28] sm:$0xff]
    %v213 = vld [vmem:[#allocation5 + $0x30] sm:$0xff]
    %v214 = vld [vmem:[#allocation5 + $0x38] sm:$0xff]
    %v215 = vld [vmem:[#allocation5 + $0x40] sm:$0xff]
    %v216 = vld [vmem:[#allocation5 + $0x48] sm:$0xff]
    %v217 = vld [vmem:[#allocation5 + $0x50] sm:$0xff]
    %v218 = vld [vmem:[#allocation5 + $0x58] sm:$0xff]
    %v219 = vld [vmem:[#allocation5 + $0x60] sm:$0xff]
    %v220 = vld [vmem:[#allocation5 + $0x68] sm:$0xff]
    %v221 = vld [vmem:[#allocation5 + $0x70] sm:$0xff]
    %v222 = vld [vmem:[#allocation5 + $0x78] sm:$0xff]
    %v223 = vld [vmem:[#allocation5 + $0x80] sm:$0xff]
    %v224 = vld [vmem:[#allocation5 + $0x88] sm:$0xff]
    %v225 = vld [vmem:[#allocation5 + $0x90] sm:$0xff]
    %v226 = vld [vmem:[#allocation5 + $0x98] sm:$0xff]
    %v227 = vld [vmem:[#allocation5 + $0xa0] sm:$0xff]
    %v228 = vld [vmem:[#allocation5 + $0xa8] sm:$0xff]
    %v229 = vld [vmem:[#allocation5 + $0xb0] sm:$0xff]
    %v230 = vld [vmem:[#allocation5 + $0xb8] sm:$0xff]
    %v231 = vld [vmem:[#allocation5 + $0xc0] sm:$0xff]
    %v232 = vld [vmem:[#allocation5 + $0xc8] sm:$0xff]
    %v233 = vld [vmem:[#allocation5 + $0xd0] sm:$0xff]
    %v234 = vld [vmem:[#allocation5 + $0xd8] sm:$0xff]
    %v235 = vld [vmem:[#allocation5 + $0xe0] sm:$0xff]
    %v236 = vld [vmem:[#allocation5 + $0xe8] sm:$0xff]
    %v237 = vld [vmem:[#allocation5 + $0xf0] sm:$0xff]
    %v238 = vld [vmem:[#allocation5 + $0xf8] sm:$0xff]
    %v239 = vld [vmem:[%s5] sm:$0x3]
    %v241 = vperm.slane %v239, 0
    %v242 = vperm.slane %v239, 1
    %vm245 = vcmask 523264
    %v247 = vsel %vm245, 0.0, 0
    %249 = vmatpush.msra.mxu0 0.0
    %250 = vmatpush.msra.mxu0 0.0
    %251 = vmatpush.msra.mxu0 0.0
    %252 = vmatpush.msra.mxu0 0.0
    %253 = vmatpush.msra.mxu0 0.0
    %254 = vmatpush.msra.mxu0 0.0
    %255 = vmatpush.msra.mxu0 0.0
    %256 = vmatpush.msra.mxu0 0.0
    %257 = vmatpush.msra.mxu0 %v205
    %258 = vmatpush.msra.mxu0 %v203
    %259 = vmatpush.msra.mxu0 %v201
    %260 = vmatpush.msra.mxu0 %v199
    %261 = vmatpush.msra.mxu0 %v197
    %262 = vmatpush.msra.mxu0 %v195
    %263 = vmatpush.msra.mxu0 %v193
    %264 = vmatpush.msra.mxu0 %v191
    %265 = vmatmul.f32.gmra.mxu0 %v247
    %v266 = vpop.f32.mrf.mxu0
    %v267 = vadd.f32 %v127, %v266
    %268 = vdwg.mxu0
    %269 = vmatpush.msra.mxu0 0.0
    %270 = vmatpush.msra.mxu0 0.0
    %271 = vmatpush.msra.mxu0 0.0
    %272 = vmatpush.msra.mxu0 0.0
    %273 = vmatpush.msra.mxu0 0.0
    %274 = vmatpush.msra.mxu0 0.0
    %275 = vmatpush.msra.mxu0 0.0
    %276 = vmatpush.msra.mxu0 0.0
    %277 = vmatpush.msra.mxu0 %v206
    %278 = vmatpush.msra.mxu0 %v204
    %279 = vmatpush.msra.mxu0 %v202
    %280 = vmatpush.msra.mxu0 %v200
    %281 = vmatpush.msra.mxu0 %v198
    %282 = vmatpush.msra.mxu0 %v196
    %283 = vmatpush.msra.mxu0 %v194
    %284 = vmatpush.msra.mxu0 %v192
    %285 = vmatmul.f32.gmra.mxu0 %v247
    %v286 = vpop.f32.mrf.mxu0
    %v287 = vadd.f32 %v168, %v286
    %288 = vdwg.mxu0
    %v289 = vxor.u32 %v267, 2147483648
    %v290 = vxor.u32 %v287, 2147483648
    %v291 = vmul.f32 %v289, 1.442695
    %v292 = vpow.pop %v291
    %v293 = vmul.f32 %v290, 1.442695
    %v294 = vpow.pop %v293
    %v295 = vadd.f32 %v292, 1.0
    %v296 = vadd.f32 %v294, 1.0
    %v297 = vrcp.pop %v295
    %v298 = vmul.f32 %v295, %v297
    %v299 = vsub.f32 1.0, %v298
    %v300 = vmul.f32 %v297, %v299
    %v301 = vadd.f32 %v297, %v300
    %vm302 = vweird.f32 %v295
    %vm303 = vweird.f32 %v297
    %vm304 = vmor %vm302, %vm303
    %v305 = vsel %vm304, %v297, %v301
    %v306 = vand.u32 2147483647, %v295
    %vm307 = vcmp.eq.f32.partialorder %v306, 8.507059e+37
    %v308 = vand.u32 %v295, 2147483648
    %v309 = vor.u32 1.1754944e-38, %v308
    %v310 = vsel %vm307, %v309, %v305
    %v311 = vmul.f32 1.0, %v310
    %v312 = vrcp.pop %v296
    %v313 = vmul.f32 %v296, %v312
    %v314 = vsub.f32 1.0, %v313
    %v315 = vmul.f32 %v312, %v314
    %v316 = vadd.f32 %v312, %v315
    %vm317 = vweird.f32 %v296
    %vm318 = vweird.f32 %v312
    %vm319 = vmor %vm317, %vm318
    %v320 = vsel %vm319, %v312, %v316
    %v321 = vand.u32 2147483647, %v296
    %vm322 = vcmp.eq.f32.partialorder %v321, 8.507059e+37
    %v323 = vand.u32 %v296, 2147483648
    %v324 = vor.u32 1.1754944e-38, %v323
    %v325 = vsel %vm322, %v324, %v320
    %v326 = vmul.f32 1.0, %v325
    %v327 = vtanh.pop %v287
    %v328 = vmul.f32 %v311, 0.0
    %330 = vrot.lane.b32.xlu0 %v327, 64
    %v331 = vpop.permute.xlu0 %330
    %v333 = vmul.f32 %v311, %v331
    %335 = vrot.lane.b32.xlu0 %v333, 64
    %v336 = vpop.permute.xlu0 %335
    %v338 = vadd.f32 %v328, %v336
    %v339 = vtanh.pop %v338
    %341 = vrot.lane.b32.xlu0 %v339, 64
    %v342 = vpop.permute.xlu0 %341
    %v344 = vmul.f32 %v326, %v342
    %v345 = vsel %vm245, %v344, 0.0
    %346 = vmatpush.msra.mxu0 %v237
    %347 = vmatpush.msra.mxu0 %v235
    %348 = vmatpush.msra.mxu0 %v233
    %349 = vmatpush.msra.mxu0 %v231
    %350 = vmatpush.msra.mxu0 %v229
    %351 = vmatpush.msra.mxu0 %v227
    %352 = vmatpush.msra.mxu0 %v225
    %353 = vmatpush.msra.mxu0 %v223
    %354 = vmatpush.msra.mxu0 %v221
    %355 = vmatpush.msra.mxu0 %v219
    %356 = vmatpush.msra.mxu0 %v217
    %357 = vmatpush.msra.mxu0 %v215
    %358 = vmatpush.msra.mxu0 %v213
    %359 = vmatpush.msra.mxu0 %v211
    %360 = vmatpush.msra.mxu0 %v209
    %361 = vmatpush.msra.mxu0 %v207
    %362 = vmatmul.f32.gmra.mxu0 %v345
    %v363 = vpop.f32.mrf.mxu0
    %v364 = vadd.f32 %v241, %v363
    %365 = vdwg.mxu0
    %366 = vmatpush.msra.mxu0 %v238
    %367 = vmatpush.msra.mxu0 %v236
    %368 = vmatpush.msra.mxu0 %v234
    %369 = vmatpush.msra.mxu0 %v232
    %370 = vmatpush.msra.mxu0 %v230
    %371 = vmatpush.msra.mxu0 %v228
    %372 = vmatpush.msra.mxu0 %v226
    %373 = vmatpush.msra.mxu0 %v224
    %374 = vmatpush.msra.mxu0 %v222
    %375 = vmatpush.msra.mxu0 %v220
    %376 = vmatpush.msra.mxu0 %v218
    %377 = vmatpush.msra.mxu0 %v216
    %378 = vmatpush.msra.mxu0 %v214
    %379 = vmatpush.msra.mxu0 %v212
    %380 = vmatpush.msra.mxu0 %v210
    %381 = vmatpush.msra.mxu0 %v208
    %382 = vmatmul.f32.gmra.mxu0 %v345
    %v383 = vpop.f32.mrf.mxu0
    %v384 = vadd.f32 %v242, %v383
    %385 = vdwg.mxu0
    %v386 = vxor.u32 %v364, 2147483648
    %v387 = vxor.u32 %v384, 2147483648
    %v388 = vmul.f32 %v386, 1.442695
    %v389 = vpow.pop %v388
    %v390 = vmul.f32 %v387, 1.442695
    %v391 = vpow.pop %v390
    %v392 = vadd.f32 %v389, 1.0
    %v393 = vadd.f32 %v391, 1.0
    %v394 = vrcp.pop %v392
    %v395 = vmul.f32 %v392, %v394
    %v396 = vsub.f32 1.0, %v395
    %v397 = vmul.f32 %v394, %v396
    %v398 = vadd.f32 %v394, %v397
    %vm399 = vweird.f32 %v392
    %vm400 = vweird.f32 %v394
    %vm401 = vmor %vm399, %vm400
    %v402 = vsel %vm401, %v394, %v398
    %v403 = vand.u32 2147483647, %v392
    %vm404 = vcmp.eq.f32.partialorder %v403, 8.507059e+37
    %v405 = vand.u32 %v392, 2147483648
    %v406 = vor.u32 1.1754944e-38, %v405
    %v407 = vsel %vm404, %v406, %v402
    %v408 = vmul.f32 1.0, %v407
    %v409 = vrcp.pop %v393
    %v410 = vmul.f32 %v393, %v409
    %v411 = vsub.f32 1.0, %v410
    %v412 = vmul.f32 %v409, %v411
    %v413 = vadd.f32 %v409, %v412
    %vm414 = vweird.f32 %v393
    %vm415 = vweird.f32 %v409
    %vm416 = vmor %vm414, %vm415
    %v417 = vsel %vm416, %v409, %v413
    %v418 = vand.u32 2147483647, %v393
    %vm419 = vcmp.eq.f32.partialorder %v418, 8.507059e+37
    %v420 = vand.u32 %v393, 2147483648
    %v421 = vor.u32 1.1754944e-38, %v420
    %v422 = vsel %vm419, %v421, %v417
    %v423 = vmul.f32 1.0, %v422
    %v424 = vtanh.pop %v384
    %v425 = vmul.f32 %v408, 0.0
    %427 = vrot.lane.b32.xlu0 %v424, 64
    %v428 = vpop.permute.xlu0 %427
    %v430 = vmul.f32 %v408, %v428
    %432 = vrot.lane.b32.xlu0 %v430, 64
    %v433 = vpop.permute.xlu0 %432
    %v435 = vadd.f32 %v425, %v433
    %v436 = vtanh.pop %v435
    %438 = vrot.lane.b32.xlu0 %v436, 64
    %v439 = vpop.permute.xlu0 %438
    %v441 = vmul.f32 %v423, %v439
    %v443 = vsel %vm245, %v344, 0
    %445 = vmatpush.msra.mxu0 0.0
    %446 = vmatpush.msra.mxu0 0.0
    %447 = vmatpush.msra.mxu0 0.0
    %448 = vmatpush.msra.mxu0 0.0
    %449 = vmatpush.msra.mxu0 0.0
    %450 = vmatpush.msra.mxu0 0.0
    %451 = vmatpush.msra.mxu0 0.0
    %452 = vmatpush.msra.mxu0 0.0
    %453 = vmatpush.msra.mxu0 %v205
    %454 = vmatpush.msra.mxu0 %v203
    %455 = vmatpush.msra.mxu0 %v201
    %456 = vmatpush.msra.mxu0 %v199
    %457 = vmatpush.msra.mxu0 %v197
    %458 = vmatpush.msra.mxu0 %v195
    %459 = vmatpush.msra.mxu0 %v193
    %460 = vmatpush.msra.mxu0 %v191
    %461 = vmatmul.f32.gmra.mxu0 %v443
    %v462 = vpop.f32.mrf.mxu0
    %v463 = vadd.f32 %v130, %v462
    %464 = vdwg.mxu0
    %465 = vmatpush.msra.mxu0 0.0
    %466 = vmatpush.msra.mxu0 0.0
    %467 = vmatpush.msra.mxu0 0.0
    %468 = vmatpush.msra.mxu0 0.0
    %469 = vmatpush.msra.mxu0 0.0
    %470 = vmatpush.msra.mxu0 0.0
    %471 = vmatpush.msra.mxu0 0.0
    %472 = vmatpush.msra.mxu0 0.0
    %473 = vmatpush.msra.mxu0 %v206
    %474 = vmatpush.msra.mxu0 %v204
    %475 = vmatpush.msra.mxu0 %v202
    %476 = vmatpush.msra.mxu0 %v200
    %477 = vmatpush.msra.mxu0 %v198
    %478 = vmatpush.msra.mxu0 %v196
    %479 = vmatpush.msra.mxu0 %v194
    %480 = vmatpush.msra.mxu0 %v192
    %481 = vmatmul.f32.gmra.mxu0 %v443
    %v482 = vpop.f32.mrf.mxu0
    %v483 = vadd.f32 %v171, %v482
    %484 = vdwg.mxu0
    %v485 = vxor.u32 %v463, 2147483648
    %v486 = vxor.u32 %v483, 2147483648
    %v487 = vmul.f32 %v485, 1.442695
    %v488 = vpow.pop %v487
    %v489 = vmul.f32 %v486, 1.442695
    %v490 = vpow.pop %v489
    %v491 = vadd.f32 %v488, 1.0
    %v492 = vadd.f32 %v490, 1.0
    %v493 = vrcp.pop %v491
    %v494 = vmul.f32 %v491, %v493
    %v495 = vsub.f32 1.0, %v494
    %v496 = vmul.f32 %v493, %v495
    %v497 = vadd.f32 %v493, %v496
    %vm498 = vweird.f32 %v491
    %vm499 = vweird.f32 %v493
    %vm500 = vmor %vm498, %vm499
    %v501 = vsel %vm500, %v493, %v497
    %v502 = vand.u32 2147483647, %v491
    %vm503 = vcmp.eq.f32.partialorder %v502, 8.507059e+37
    %v504 = vand.u32 %v491, 2147483648
    %v505 = vor.u32 1.1754944e-38, %v504
    %v506 = vsel %vm503, %v505, %v501
    %v507 = vmul.f32 1.0, %v506
    %v508 = vrcp.pop %v492
    %v509 = vmul.f32 %v492, %v508
    %v510 = vsub.f32 1.0, %v509
    %v511 = vmul.f32 %v508, %v510
    %v512 = vadd.f32 %v508, %v511
    %vm513 = vweird.f32 %v492
    %vm514 = vweird.f32 %v508
    %vm515 = vmor %vm513, %vm514
    %v516 = vsel %vm515, %v508, %v512
    %v517 = vand.u32 2147483647, %v492
    %vm518 = vcmp.eq.f32.partialorder %v517, 8.507059e+37
    %v519 = vand.u32 %v492, 2147483648
    %v520 = vor.u32 1.1754944e-38, %v519
    %v521 = vsel %vm518, %v520, %v516
    %v522 = vmul.f32 1.0, %v521
    %v523 = vtanh.pop %v483
    %v524 = vmul.f32 %v507, %v338
    %526 = vrot.lane.b32.xlu0 %v523, 64
    %v527 = vpop.permute.xlu0 %526
    %v529 = vmul.f32 %v507, %v527
    %531 = vrot.lane.b32.xlu0 %v529, 64
    %v532 = vpop.permute.xlu0 %531
    %v534 = vadd.f32 %v524, %v532
    %v535 = vtanh.pop %v534
    %537 = vrot.lane.b32.xlu0 %v535, 64
    %v538 = vpop.permute.xlu0 %537
    %v540 = vmul.f32 %v522, %v538
    %542 = vrot.lane.b32.xlu0 %v441, 64
    %v543 = vpop.permute.xlu0 %542
    %v545 = vsel %vm245, %v540, %v543
    %546 = vmatpush.msra.mxu0 %v237
    %547 = vmatpush.msra.mxu0 %v235
    %548 = vmatpush.msra.mxu0 %v233
    %549 = vmatpush.msra.mxu0 %v231
    %550 = vmatpush.msra.mxu0 %v229
    %551 = vmatpush.msra.mxu0 %v227
    %552 = vmatpush.msra.mxu0 %v225
    %553 = vmatpush.msra.mxu0 %v223
    %554 = vmatpush.msra.mxu0 %v221
    %555 = vmatpush.msra.mxu0 %v219
    %556 = vmatpush.msra.mxu0 %v217
    %557 = vmatpush.msra.mxu0 %v215
    %558 = vmatpush.msra.mxu0 %v213
    %559 = vmatpush.msra.mxu0 %v211
    %560 = vmatpush.msra.mxu0 %v209
    %561 = vmatpush.msra.mxu0 %v207
    %562 = vmatmul.f32.gmra.mxu0 %v545
    %v563 = vpop.f32.mrf.mxu0
    %v564 = vadd.f32 %v241, %v563
    %565 = vdwg.mxu0
    %566 = vmatpush.msra.mxu0 %v238
    %567 = vmatpush.msra.mxu0 %v236
    %568 = vmatpush.msra.mxu0 %v234
    %569 = vmatpush.msra.mxu0 %v232
    %570 = vmatpush.msra.mxu0 %v230
    %571 = vmatpush.msra.mxu0 %v228
    %572 = vmatpush.msra.mxu0 %v226
    %573 = vmatpush.msra.mxu0 %v224
    %574 = vmatpush.msra.mxu0 %v222
    %575 = vmatpush.msra.mxu0 %v220
    %576 = vmatpush.msra.mxu0 %v218
    %577 = vmatpush.msra.mxu0 %v216
    %578 = vmatpush.msra.mxu0 %v214
    %579 = vmatpush.msra.mxu0 %v212
    %580 = vmatpush.msra.mxu0 %v210
    %581 = vmatpush.msra.mxu0 %v208
    %582 = vmatmul.f32.gmra.mxu0 %v545
    %v583 = vpop.f32.mrf.mxu0
    %v584 = vadd.f32 %v242, %v583
    %585 = vdwg.mxu0
    %v586 = vxor.u32 %v564, 2147483648
    %v587 = vxor.u32 %v584, 2147483648
    %v588 = vmul.f32 %v586, 1.442695
    %v589 = vpow.pop %v588
    %v590 = vmul.f32 %v587, 1.442695
    %v591 = vpow.pop %v590
    %v592 = vadd.f32 %v589, 1.0
    %v593 = vadd.f32 %v591, 1.0
    %v594 = vrcp.pop %v592
    %v595 = vmul.f32 %v592, %v594
    %v596 = vsub.f32 1.0, %v595
    %v597 = vmul.f32 %v594, %v596
    %v598 = vadd.f32 %v594, %v597
    %vm599 = vweird.f32 %v592
    %vm600 = vweird.f32 %v594
    %vm601 = vmor %vm599, %vm600
    %v602 = vsel %vm601, %v594, %v598
    %v603 = vand.u32 2147483647, %v592
    %vm604 = vcmp.eq.f32.partialorder %v603, 8.507059e+37
    %v605 = vand.u32 %v592, 2147483648
    %v606 = vor.u32 1.1754944e-38, %v605
    %v607 = vsel %vm604, %v606, %v602
    %v608 = vmul.f32 1.0, %v607
    %v609 = vrcp.pop %v593
    %v610 = vmul.f32 %v593, %v609
    %v611 = vsub.f32 1.0, %v610
    %v612 = vmul.f32 %v609, %v611
    %v613 = vadd.f32 %v609, %v612
    %vm614 = vweird.f32 %v593
    %vm615 = vweird.f32 %v609
    %vm616 = vmor %vm614, %vm615
    %v617 = vsel %vm616, %v609, %v613
    %v618 = vand.u32 2147483647, %v593
    %vm619 = vcmp.eq.f32.partialorder %v618, 8.507059e+37
    %v620 = vand.u32 %v593, 2147483648
    %v621 = vor.u32 1.1754944e-38, %v620
    %v622 = vsel %vm619, %v621, %v617
    %v623 = vmul.f32 1.0, %v622
    %v624 = vtanh.pop %v584
    %v625 = vmul.f32 %v608, %v435
    %627 = vrot.lane.b32.xlu0 %v624, 64
    %v628 = vpop.permute.xlu0 %627
    %v630 = vmul.f32 %v608, %v628
    %632 = vrot.lane.b32.xlu0 %v630, 64
    %v633 = vpop.permute.xlu0 %632
    %v635 = vadd.f32 %v625, %v633
    %v636 = vtanh.pop %v635
    %638 = vrot.lane.b32.xlu0 %v636, 64
    %v639 = vpop.permute.xlu0 %638
    %v641 = vmul.f32 %v623, %v639
    %v643 = vsel %vm245, %v540, 0
    %645 = vmatpush.msra.mxu0 0.0
    %646 = vmatpush.msra.mxu0 0.0
    %647 = vmatpush.msra.mxu0 0.0
    %648 = vmatpush.msra.mxu0 0.0
    %649 = vmatpush.msra.mxu0 0.0
    %650 = vmatpush.msra.mxu0 0.0
    %651 = vmatpush.msra.mxu0 0.0
    %652 = vmatpush.msra.mxu0 0.0
    %653 = vmatpush.msra.mxu0 %v205
    %654 = vmatpush.msra.mxu0 %v203
    %655 = vmatpush.msra.mxu0 %v201
    %656 = vmatpush.msra.mxu0 %v199
    %657 = vmatpush.msra.mxu0 %v197
    %658 = vmatpush.msra.mxu0 %v195
    %659 = vmatpush.msra.mxu0 %v193
    %660 = vmatpush.msra.mxu0 %v191
    %661 = vmatmul.f32.gmra.mxu0 %v643
    %v662 = vpop.f32.mrf.mxu0
    %v663 = vadd.f32 %v133, %v662
    %664 = vdwg.mxu0
    %665 = vmatpush.msra.mxu0 0.0
    %666 = vmatpush.msra.mxu0 0.0
    %667 = vmatpush.msra.mxu0 0.0
    %668 = vmatpush.msra.mxu0 0.0
    %669 = vmatpush.msra.mxu0 0.0
    %670 = vmatpush.msra.mxu0 0.0
    %671 = vmatpush.msra.mxu0 0.0
    %672 = vmatpush.msra.mxu0 0.0
    %673 = vmatpush.msra.mxu0 %v206
    %674 = vmatpush.msra.mxu0 %v204
    %675 = vmatpush.msra.mxu0 %v202
    %676 = vmatpush.msra.mxu0 %v200
    %677 = vmatpush.msra.mxu0 %v198
    %678 = vmatpush.msra.mxu0 %v196
    %679 = vmatpush.msra.mxu0 %v194
    %680 = vmatpush.msra.mxu0 %v192
    %681 = vmatmul.f32.gmra.mxu0 %v643
    %v682 = vpop.f32.mrf.mxu0
    %v683 = vadd.f32 %v174, %v682
    %684 = vdwg.mxu0
    %v685 = vxor.u32 %v663, 2147483648
    %v686 = vxor.u32 %v683, 2147483648
    %v687 = vmul.f32 %v685, 1.442695
    %v688 = vpow.pop %v687
    %v689 = vmul.f32 %v686, 1.442695
    %v690 = vpow.pop %v689
    %v691 = vadd.f32 %v688, 1.0
    %v692 = vadd.f32 %v690, 1.0
    %v693 = vrcp.pop %v691
    %v694 = vmul.f32 %v691, %v693
    %v695 = vsub.f32 1.0, %v694
    %v696 = vmul.f32 %v693, %v695
    %v697 = vadd.f32 %v693, %v696
    %vm698 = vweird.f32 %v691
    %vm699 = vweird.f32 %v693
    %vm700 = vmor %vm698, %vm699
    %v701 = vsel %vm700, %v693, %v697
    %v702 = vand.u32 2147483647, %v691
    %vm703 = vcmp.eq.f32.partialorder %v702, 8.507059e+37
    %v704 = vand.u32 %v691, 2147483648
    %v705 = vor.u32 1.1754944e-38, %v704
    %v706 = vsel %vm703, %v705, %v701
    %v707 = vmul.f32 1.0, %v706
    %v708 = vrcp.pop %v692
    %v709 = vmul.f32 %v692, %v708
    %v710 = vsub.f32 1.0, %v709
    %v711 = vmul.f32 %v708, %v710
    %v712 = vadd.f32 %v708, %v711
    %vm713 = vweird.f32 %v692
    %vm714 = vweird.f32 %v708
    %vm715 = vmor %vm713, %vm714
    %v716 = vsel %vm715, %v708, %v712
    %v717 = vand.u32 2147483647, %v692
    %vm718 = vcmp.eq.f32.partialorder %v717, 8.507059e+37
    %v719 = vand.u32 %v692, 2147483648
    %v720 = vor.u32 1.1754944e-38, %v719
    %v721 = vsel %vm718, %v720, %v716
    %v722 = vmul.f32 1.0, %v721
    %v723 = vtanh.pop %v683
    %v724 = vmul.f32 %v707, %v534
    %726 = vrot.lane.b32.xlu0 %v723, 64
    %v727 = vpop.permute.xlu0 %726
    %v729 = vmul.f32 %v707, %v727
    %731 = vrot.lane.b32.xlu0 %v729, 64
    %v732 = vpop.permute.xlu0 %731
    %v734 = vadd.f32 %v724, %v732
    %v735 = vtanh.pop %v734
    %737 = vrot.lane.b32.xlu0 %v735, 64
    %v738 = vpop.permute.xlu0 %737
    %v740 = vmul.f32 %v722, %v738
    %742 = vrot.lane.b32.xlu0 %v641, 64
    %v743 = vpop.permute.xlu0 %742
    %v745 = vsel %vm245, %v740, %v743
    %746 = vmatpush.msra.mxu0 %v237
    %747 = vmatpush.msra.mxu0 %v235
    %748 = vmatpush.msra.mxu0 %v233
    %749 = vmatpush.msra.mxu0 %v231
    %750 = vmatpush.msra.mxu0 %v229
    %751 = vmatpush.msra.mxu0 %v227
    %752 = vmatpush.msra.mxu0 %v225
    %753 = vmatpush.msra.mxu0 %v223
    %754 = vmatpush.msra.mxu0 %v221
    %755 = vmatpush.msra.mxu0 %v219
    %756 = vmatpush.msra.mxu0 %v217
    %757 = vmatpush.msra.mxu0 %v215
    %758 = vmatpush.msra.mxu0 %v213
    %759 = vmatpush.msra.mxu0 %v211
    %760 = vmatpush.msra.mxu0 %v209
    %761 = vmatpush.msra.mxu0 %v207
    %762 = vmatmul.f32.gmra.mxu0 %v745
    %v763 = vpop.f32.mrf.mxu0
    %v764 = vadd.f32 %v241, %v763
    %765 = vdwg.mxu0
    %766 = vmatpush.msra.mxu0 %v238
    %767 = vmatpush.msra.mxu0 %v236
    %768 = vmatpush.msra.mxu0 %v234
    %769 = vmatpush.msra.mxu0 %v232
    %770 = vmatpush.msra.mxu0 %v230
    %771 = vmatpush.msra.mxu0 %v228
    %772 = vmatpush.msra.mxu0 %v226
    %773 = vmatpush.msra.mxu0 %v224
    %774 = vmatpush.msra.mxu0 %v222
    %775 = vmatpush.msra.mxu0 %v220
    %776 = vmatpush.msra.mxu0 %v218
    %777 = vmatpush.msra.mxu0 %v216
    %778 = vmatpush.msra.mxu0 %v214
    %779 = vmatpush.msra.mxu0 %v212
    %780 = vmatpush.msra.mxu0 %v210
    %781 = vmatpush.msra.mxu0 %v208
    %782 = vmatmul.f32.gmra.mxu0 %v745
    %v783 = vpop.f32.mrf.mxu0
    %v784 = vadd.f32 %v242, %v783
    %785 = vdwg.mxu0
    %v786 = vxor.u32 %v764, 2147483648
    %v787 = vxor.u32 %v784, 2147483648
    %v788 = vmul.f32 %v786, 1.442695
    %v789 = vpow.pop %v788
    %v790 = vmul.f32 %v787, 1.442695
    %v791 = vpow.pop %v790
    %v792 = vadd.f32 %v789, 1.0
    %v793 = vadd.f32 %v791, 1.0
    %v794 = vrcp.pop %v792
    %v795 = vmul.f32 %v792, %v794
    %v796 = vsub.f32 1.0, %v795
    %v797 = vmul.f32 %v794, %v796
    %v798 = vadd.f32 %v794, %v797
    %vm799 = vweird.f32 %v792
    %vm800 = vweird.f32 %v794
    %vm801 = vmor %vm799, %vm800
    %v802 = vsel %vm801, %v794, %v798
    %v803 = vand.u32 2147483647, %v792
    %vm804 = vcmp.eq.f32.partialorder %v803, 8.507059e+37
    %v805 = vand.u32 %v792, 2147483648
    %v806 = vor.u32 1.1754944e-38, %v805
    %v807 = vsel %vm804, %v806, %v802
    %v808 = vmul.f32 1.0, %v807
    %v809 = vrcp.pop %v793
    %v810 = vmul.f32 %v793, %v809
    %v811 = vsub.f32 1.0, %v810
    %v812 = vmul.f32 %v809, %v811
    %v813 = vadd.f32 %v809, %v812
    %vm814 = vweird.f32 %v793
    %vm815 = vweird.f32 %v809
    %vm816 = vmor %vm814, %vm815
    %v817 = vsel %vm816, %v809, %v813
    %v818 = vand.u32 2147483647, %v793
    %vm819 = vcmp.eq.f32.partialorder %v818, 8.507059e+37
    %v820 = vand.u32 %v793, 2147483648
    %v821 = vor.u32 1.1754944e-38, %v820
    %v822 = vsel %vm819, %v821, %v817
    %v823 = vmul.f32 1.0, %v822
    %v824 = vtanh.pop %v784
    %v825 = vmul.f32 %v808, %v635
    %827 = vrot.lane.b32.xlu0 %v824, 64
    %v828 = vpop.permute.xlu0 %827
    %v830 = vmul.f32 %v808, %v828
    %832 = vrot.lane.b32.xlu0 %v830, 64
    %v833 = vpop.permute.xlu0 %832
    %v835 = vadd.f32 %v825, %v833
    %v836 = vtanh.pop %v835
    %838 = vrot.lane.b32.xlu0 %v836, 64
    %v839 = vpop.permute.xlu0 %838
    %v841 = vmul.f32 %v823, %v839
    %v843 = vsel %vm245, %v740, 0
    %845 = vmatpush.msra.mxu0 0.0
    %846 = vmatpush.msra.mxu0 0.0
    %847 = vmatpush.msra.mxu0 0.0
    %848 = vmatpush.msra.mxu0 0.0
    %849 = vmatpush.msra.mxu0 0.0
    %850 = vmatpush.msra.mxu0 0.0
    %851 = vmatpush.msra.mxu0 0.0
    %852 = vmatpush.msra.mxu0 0.0
    %853 = vmatpush.msra.mxu0 %v205
    %854 = vmatpush.msra.mxu0 %v203
    %855 = vmatpush.msra.mxu0 %v201
    %856 = vmatpush.msra.mxu0 %v199
    %857 = vmatpush.msra.mxu0 %v197
    %858 = vmatpush.msra.mxu0 %v195
    %859 = vmatpush.msra.mxu0 %v193
    %860 = vmatpush.msra.mxu0 %v191
    %861 = vmatmul.f32.gmra.mxu0 %v843
    %v862 = vpop.f32.mrf.mxu0
    %v863 = vadd.f32 %v136, %v862
    %864 = vdwg.mxu0
    %865 = vmatpush.msra.mxu0 0.0
    %866 = vmatpush.msra.mxu0 0.0
    %867 = vmatpush.msra.mxu0 0.0
    %868 = vmatpush.msra.mxu0 0.0
    %869 = vmatpush.msra.mxu0 0.0
    %870 = vmatpush.msra.mxu0 0.0
    %871 = vmatpush.msra.mxu0 0.0
    %872 = vmatpush.msra.mxu0 0.0
    %873 = vmatpush.msra.mxu0 %v206
    %874 = vmatpush.msra.mxu0 %v204
    %875 = vmatpush.msra.mxu0 %v202
    %876 = vmatpush.msra.mxu0 %v200
    %877 = vmatpush.msra.mxu0 %v198
    %878 = vmatpush.msra.mxu0 %v196
    %879 = vmatpush.msra.mxu0 %v194
    %880 = vmatpush.msra.mxu0 %v192
    %881 = vmatmul.f32.gmra.mxu0 %v843
    %v882 = vpop.f32.mrf.mxu0
    %v883 = vadd.f32 %v177, %v882
    %884 = vdwg.mxu0
    %v885 = vxor.u32 %v863, 2147483648
    %v886 = vxor.u32 %v883, 2147483648
    %v887 = vmul.f32 %v885, 1.442695
    %v888 = vpow.pop %v887
    %v889 = vmul.f32 %v886, 1.442695
    %v890 = vpow.pop %v889
    %v891 = vadd.f32 %v888, 1.0
    %v892 = vadd.f32 %v890, 1.0
    %v893 = vrcp.pop %v891
    %v894 = vmul.f32 %v891, %v893
    %v895 = vsub.f32 1.0, %v894
    %v896 = vmul.f32 %v893, %v895
    %v897 = vadd.f32 %v893, %v896
    %vm898 = vweird.f32 %v891
    %vm899 = vweird.f32 %v893
    %vm900 = vmor %vm898, %vm899
    %v901 = vsel %vm900, %v893, %v897
    %v902 = vand.u32 2147483647, %v891
    %vm903 = vcmp.eq.f32.partialorder %v902, 8.507059e+37
    %v904 = vand.u32 %v891, 2147483648
    %v905 = vor.u32 1.1754944e-38, %v904
    %v906 = vsel %vm903, %v905, %v901
    %v907 = vmul.f32 1.0, %v906
    %v908 = vrcp.pop %v892
    %v909 = vmul.f32 %v892, %v908
    %v910 = vsub.f32 1.0, %v909
    %v911 = vmul.f32 %v908, %v910
    %v912 = vadd.f32 %v908, %v911
    %vm913 = vweird.f32 %v892
    %vm914 = vweird.f32 %v908
    %vm915 = vmor %vm913, %vm914
    %v916 = vsel %vm915, %v908, %v912
    %v917 = vand.u32 2147483647, %v892
    %vm918 = vcmp.eq.f32.partialorder %v917, 8.507059e+37
    %v919 = vand.u32 %v892, 2147483648
    %v920 = vor.u32 1.1754944e-38, %v919
    %v921 = vsel %vm918, %v920, %v916
    %v922 = vmul.f32 1.0, %v921
    %v923 = vtanh.pop %v883
    %v924 = vmul.f32 %v907, %v734
    %926 = vrot.lane.b32.xlu0 %v923, 64
    %v927 = vpop.permute.xlu0 %926
    %v929 = vmul.f32 %v907, %v927
    %931 = vrot.lane.b32.xlu0 %v929, 64
    %v932 = vpop.permute.xlu0 %931
    %v934 = vadd.f32 %v924, %v932
    %v935 = vtanh.pop %v934
    %937 = vrot.lane.b32.xlu0 %v935, 64
    %v938 = vpop.permute.xlu0 %937
    %v940 = vmul.f32 %v922, %v938
    %942 = vrot.lane.b32.xlu0 %v841, 64
    %v943 = vpop.permute.xlu0 %942
    %v945 = vsel %vm245, %v940, %v943
    %946 = vmatpush.msra.mxu0 %v237
    %947 = vmatpush.msra.mxu0 %v235
    %948 = vmatpush.msra.mxu0 %v233
    %949 = vmatpush.msra.mxu0 %v231
    %950 = vmatpush.msra.mxu0 %v229
    %951 = vmatpush.msra.mxu0 %v227
    %952 = vmatpush.msra.mxu0 %v225
    %953 = vmatpush.msra.mxu0 %v223
    %954 = vmatpush.msra.mxu0 %v221
    %955 = vmatpush.msra.mxu0 %v219
    %956 = vmatpush.msra.mxu0 %v217
    %957 = vmatpush.msra.mxu0 %v215
    %958 = vmatpush.msra.mxu0 %v213
    %959 = vmatpush.msra.mxu0 %v211
    %960 = vmatpush.msra.mxu0 %v209
    %961 = vmatpush.msra.mxu0 %v207
    %962 = vmatmul.f32.gmra.mxu0 %v945
    %v963 = vpop.f32.mrf.mxu0
    %v964 = vadd.f32 %v241, %v963
    %965 = vdwg.mxu0
    %966 = vmatpush.msra.mxu0 %v238
    %967 = vmatpush.msra.mxu0 %v236
    %968 = vmatpush.msra.mxu0 %v234
    %969 = vmatpush.msra.mxu0 %v232
    %970 = vmatpush.msra.mxu0 %v230
    %971 = vmatpush.msra.mxu0 %v228
    %972 = vmatpush.msra.mxu0 %v226
    %973 = vmatpush.msra.mxu0 %v224
    %974 = vmatpush.msra.mxu0 %v222
    %975 = vmatpush.msra.mxu0 %v220
    %976 = vmatpush.msra.mxu0 %v218
    %977 = vmatpush.msra.mxu0 %v216
    %978 = vmatpush.msra.mxu0 %v214
    %979 = vmatpush.msra.mxu0 %v212
    %980 = vmatpush.msra.mxu0 %v210
    %981 = vmatpush.msra.mxu0 %v208
    %982 = vmatmul.f32.gmra.mxu0 %v945
    %v983 = vpop.f32.mrf.mxu0
    %v984 = vadd.f32 %v242, %v983
    %985 = vdwg.mxu0
    %v986 = vxor.u32 %v964, 2147483648
    %v987 = vxor.u32 %v984, 2147483648
    %v988 = vmul.f32 %v986, 1.442695
    %v989 = vpow.pop %v988
    %v990 = vmul.f32 %v987, 1.442695
    %v991 = vpow.pop %v990
    %v992 = vadd.f32 %v989, 1.0
    %v993 = vadd.f32 %v991, 1.0
    %v994 = vrcp.pop %v992
    %v995 = vmul.f32 %v992, %v994
    %v996 = vsub.f32 1.0, %v995
    %v997 = vmul.f32 %v994, %v996
    %v998 = vadd.f32 %v994, %v997
    %vm999 = vweird.f32 %v992
    %vm1000 = vweird.f32 %v994
    %vm1001 = vmor %vm999, %vm1000
    %v1002 = vsel %vm1001, %v994, %v998
    %v1003 = vand.u32 2147483647, %v992
    %vm1004 = vcmp.eq.f32.partialorder %v1003, 8.507059e+37
    %v1005 = vand.u32 %v992, 2147483648
    %v1006 = vor.u32 1.1754944e-38, %v1005
    %v1007 = vsel %vm1004, %v1006, %v1002
    %v1008 = vmul.f32 1.0, %v1007
    %v1009 = vrcp.pop %v993
    %v1010 = vmul.f32 %v993, %v1009
    %v1011 = vsub.f32 1.0, %v1010
    %v1012 = vmul.f32 %v1009, %v1011
    %v1013 = vadd.f32 %v1009, %v1012
    %vm1014 = vweird.f32 %v993
    %vm1015 = vweird.f32 %v1009
    %vm1016 = vmor %vm1014, %vm1015
    %v1017 = vsel %vm1016, %v1009, %v1013
    %v1018 = vand.u32 2147483647, %v993
    %vm1019 = vcmp.eq.f32.partialorder %v1018, 8.507059e+37
    %v1020 = vand.u32 %v993, 2147483648
    %v1021 = vor.u32 1.1754944e-38, %v1020
    %v1022 = vsel %vm1019, %v1021, %v1017
    %v1023 = vmul.f32 1.0, %v1022
    %v1024 = vtanh.pop %v984
    %v1025 = vmul.f32 %v1008, %v835
    %1027 = vrot.lane.b32.xlu0 %v1024, 64
    %v1028 = vpop.permute.xlu0 %1027
    %v1030 = vmul.f32 %v1008, %v1028
    %1032 = vrot.lane.b32.xlu0 %v1030, 64
    %v1033 = vpop.permute.xlu0 %1032
    %v1035 = vadd.f32 %v1025, %v1033
    %v1036 = vtanh.pop %v1035
    %1038 = vrot.lane.b32.xlu0 %v1036, 64
    %v1039 = vpop.permute.xlu0 %1038
    %v1041 = vmul.f32 %v1023, %v1039
    %v1043 = vsel %vm245, %v940, 0
    %1045 = vmatpush.msra.mxu0 0.0
    %1046 = vmatpush.msra.mxu0 0.0
    %1047 = vmatpush.msra.mxu0 0.0
    %1048 = vmatpush.msra.mxu0 0.0
    %1049 = vmatpush.msra.mxu0 0.0
    %1050 = vmatpush.msra.mxu0 0.0
    %1051 = vmatpush.msra.mxu0 0.0
    %1052 = vmatpush.msra.mxu0 0.0
    %1053 = vmatpush.msra.mxu0 %v205
    %1054 = vmatpush.msra.mxu0 %v203
    %1055 = vmatpush.msra.mxu0 %v201
    %1056 = vmatpush.msra.mxu0 %v199
    %1057 = vmatpush.msra.mxu0 %v197
    %1058 = vmatpush.msra.mxu0 %v195
    %1059 = vmatpush.msra.mxu0 %v193
    %1060 = vmatpush.msra.mxu0 %v191
    %1061 = vmatmul.f32.gmra.mxu0 %v1043
    %v1062 = vpop.f32.mrf.mxu0
    %v1063 = vadd.f32 %v139, %v1062
    %1064 = vdwg.mxu0
    %1065 = vmatpush.msra.mxu0 0.0
    %1066 = vmatpush.msra.mxu0 0.0
    %1067 = vmatpush.msra.mxu0 0.0
    %1068 = vmatpush.msra.mxu0 0.0
    %1069 = vmatpush.msra.mxu0 0.0
    %1070 = vmatpush.msra.mxu0 0.0
    %1071 = vmatpush.msra.mxu0 0.0
    %1072 = vmatpush.msra.mxu0 0.0
    %1073 = vmatpush.msra.mxu0 %v206
    %1074 = vmatpush.msra.mxu0 %v204
    %1075 = vmatpush.msra.mxu0 %v202
    %1076 = vmatpush.msra.mxu0 %v200
    %1077 = vmatpush.msra.mxu0 %v198
    %1078 = vmatpush.msra.mxu0 %v196
    %1079 = vmatpush.msra.mxu0 %v194
    %1080 = vmatpush.msra.mxu0 %v192
    %1081 = vmatmul.f32.gmra.mxu0 %v1043
    %v1082 = vpop.f32.mrf.mxu0
    %v1083 = vadd.f32 %v180, %v1082
    %1084 = vdwg.mxu0
    %v1085 = vxor.u32 %v1063, 2147483648
    %v1086 = vxor.u32 %v1083, 2147483648
    %v1087 = vmul.f32 %v1085, 1.442695
    %v1088 = vpow.pop %v1087
    %v1089 = vmul.f32 %v1086, 1.442695
    %v1090 = vpow.pop %v1089
    %v1091 = vadd.f32 %v1088, 1.0
    %v1092 = vadd.f32 %v1090, 1.0
    %v1093 = vrcp.pop %v1091
    %v1094 = vmul.f32 %v1091, %v1093
    %v1095 = vsub.f32 1.0, %v1094
    %v1096 = vmul.f32 %v1093, %v1095
    %v1097 = vadd.f32 %v1093, %v1096
    %vm1098 = vweird.f32 %v1091
    %vm1099 = vweird.f32 %v1093
    %vm1100 = vmor %vm1098, %vm1099
    %v1101 = vsel %vm1100, %v1093, %v1097
    %v1102 = vand.u32 2147483647, %v1091
    %vm1103 = vcmp.eq.f32.partialorder %v1102, 8.507059e+37
    %v1104 = vand.u32 %v1091, 2147483648
    %v1105 = vor.u32 1.1754944e-38, %v1104
    %v1106 = vsel %vm1103, %v1105, %v1101
    %v1107 = vmul.f32 1.0, %v1106
    %v1108 = vrcp.pop %v1092
    %v1109 = vmul.f32 %v1092, %v1108
    %v1110 = vsub.f32 1.0, %v1109
    %v1111 = vmul.f32 %v1108, %v1110
    %v1112 = vadd.f32 %v1108, %v1111
    %vm1113 = vweird.f32 %v1092
    %vm1114 = vweird.f32 %v1108
    %vm1115 = vmor %vm1113, %vm1114
    %v1116 = vsel %vm1115, %v1108, %v1112
    %v1117 = vand.u32 2147483647, %v1092
    %vm1118 = vcmp.eq.f32.partialorder %v1117, 8.507059e+37
    %v1119 = vand.u32 %v1092, 2147483648
    %v1120 = vor.u32 1.1754944e-38, %v1119
    %v1121 = vsel %vm1118, %v1120, %v1116
    %v1122 = vmul.f32 1.0, %v1121
    %v1123 = vtanh.pop %v1083
    %v1124 = vmul.f32 %v1107, %v934
    %1126 = vrot.lane.b32.xlu0 %v1123, 64
    %v1127 = vpop.permute.xlu0 %1126
    %v1129 = vmul.f32 %v1107, %v1127
    %1131 = vrot.lane.b32.xlu0 %v1129, 64
    %v1132 = vpop.permute.xlu0 %1131
    %v1134 = vadd.f32 %v1124, %v1132
    %v1135 = vtanh.pop %v1134
    %1137 = vrot.lane.b32.xlu0 %v1135, 64
    %v1138 = vpop.permute.xlu0 %1137
    %v1140 = vmul.f32 %v1122, %v1138
    %1142 = vrot.lane.b32.xlu0 %v1041, 64
    %v1143 = vpop.permute.xlu0 %1142
    %v1145 = vsel %vm245, %v1140, %v1143
    %1146 = vmatpush.msra.mxu0 %v237
    %1147 = vmatpush.msra.mxu0 %v235
    %1148 = vmatpush.msra.mxu0 %v233
    %1149 = vmatpush.msra.mxu0 %v231
    %1150 = vmatpush.msra.mxu0 %v229
    %1151 = vmatpush.msra.mxu0 %v227
    %1152 = vmatpush.msra.mxu0 %v225
    %1153 = vmatpush.msra.mxu0 %v223
    %1154 = vmatpush.msra.mxu0 %v221
    %1155 = vmatpush.msra.mxu0 %v219
    %1156 = vmatpush.msra.mxu0 %v217
    %1157 = vmatpush.msra.mxu0 %v215
    %1158 = vmatpush.msra.mxu0 %v213
    %1159 = vmatpush.msra.mxu0 %v211
    %1160 = vmatpush.msra.mxu0 %v209
    %1161 = vmatpush.msra.mxu0 %v207
    %1162 = vmatmul.f32.gmra.mxu0 %v1145
    %v1163 = vpop.f32.mrf.mxu0
    %v1164 = vadd.f32 %v241, %v1163
    %1165 = vdwg.mxu0
    %1166 = vmatpush.msra.mxu0 %v238
    %1167 = vmatpush.msra.mxu0 %v236
    %1168 = vmatpush.msra.mxu0 %v234
    %1169 = vmatpush.msra.mxu0 %v232
    %1170 = vmatpush.msra.mxu0 %v230
    %1171 = vmatpush.msra.mxu0 %v228
    %1172 = vmatpush.msra.mxu0 %v226
    %1173 = vmatpush.msra.mxu0 %v224
    %1174 = vmatpush.msra.mxu0 %v222
    %1175 = vmatpush.msra.mxu0 %v220
    %1176 = vmatpush.msra.mxu0 %v218
    %1177 = vmatpush.msra.mxu0 %v216
    %1178 = vmatpush.msra.mxu0 %v214
    %1179 = vmatpush.msra.mxu0 %v212
    %1180 = vmatpush.msra.mxu0 %v210
    %1181 = vmatpush.msra.mxu0 %v208
    %1182 = vmatmul.f32.gmra.mxu0 %v1145
    %v1183 = vpop.f32.mrf.mxu0
    %v1184 = vadd.f32 %v242, %v1183
    %1185 = vdwg.mxu0
    %v1186 = vxor.u32 %v1164, 2147483648
    %v1187 = vxor.u32 %v1184, 2147483648
    %v1188 = vmul.f32 %v1186, 1.442695
    %v1189 = vpow.pop %v1188
    %v1190 = vmul.f32 %v1187, 1.442695
    %v1191 = vpow.pop %v1190
    %v1192 = vadd.f32 %v1189, 1.0
    %v1193 = vadd.f32 %v1191, 1.0
    %v1194 = vrcp.pop %v1192
    %v1195 = vmul.f32 %v1192, %v1194
    %v1196 = vsub.f32 1.0, %v1195
    %v1197 = vmul.f32 %v1194, %v1196
    %v1198 = vadd.f32 %v1194, %v1197
    %vm1199 = vweird.f32 %v1192
    %vm1200 = vweird.f32 %v1194
    %vm1201 = vmor %vm1199, %vm1200
    %v1202 = vsel %vm1201, %v1194, %v1198
    %v1203 = vand.u32 2147483647, %v1192
    %vm1204 = vcmp.eq.f32.partialorder %v1203, 8.507059e+37
    %v1205 = vand.u32 %v1192, 2147483648
    %v1206 = vor.u32 1.1754944e-38, %v1205
    %v1207 = vsel %vm1204, %v1206, %v1202
    %v1208 = vmul.f32 1.0, %v1207
    %v1209 = vrcp.pop %v1193
    %v1210 = vmul.f32 %v1193, %v1209
    %v1211 = vsub.f32 1.0, %v1210
    %v1212 = vmul.f32 %v1209, %v1211
    %v1213 = vadd.f32 %v1209, %v1212
    %vm1214 = vweird.f32 %v1193
    %vm1215 = vweird.f32 %v1209
    %vm1216 = vmor %vm1214, %vm1215
    %v1217 = vsel %vm1216, %v1209, %v1213
    %v1218 = vand.u32 2147483647, %v1193
    %vm1219 = vcmp.eq.f32.partialorder %v1218, 8.507059e+37
    %v1220 = vand.u32 %v1193, 2147483648
    %v1221 = vor.u32 1.1754944e-38, %v1220
    %v1222 = vsel %vm1219, %v1221, %v1217
    %v1223 = vmul.f32 1.0, %v1222
    %v1224 = vtanh.pop %v1184
    %v1225 = vmul.f32 %v1208, %v1035
    %1227 = vrot.lane.b32.xlu0 %v1224, 64
    %v1228 = vpop.permute.xlu0 %1227
    %v1230 = vmul.f32 %v1208, %v1228
    %1232 = vrot.lane.b32.xlu0 %v1230, 64
    %v1233 = vpop.permute.xlu0 %1232
    %v1235 = vadd.f32 %v1225, %v1233
    %v1236 = vtanh.pop %v1235
    %1238 = vrot.lane.b32.xlu0 %v1236, 64
    %v1239 = vpop.permute.xlu0 %1238
    %v1241 = vmul.f32 %v1223, %v1239
    %v1243 = vsel %vm245, %v1140, 0
    %1245 = vmatpush.msra.mxu0 0.0
    %1246 = vmatpush.msra.mxu0 0.0
    %1247 = vmatpush.msra.mxu0 0.0
    %1248 = vmatpush.msra.mxu0 0.0
    %1249 = vmatpush.msra.mxu0 0.0
    %1250 = vmatpush.msra.mxu0 0.0
    %1251 = vmatpush.msra.mxu0 0.0
    %1252 = vmatpush.msra.mxu0 0.0
    %1253 = vmatpush.msra.mxu0 %v205
    %1254 = vmatpush.msra.mxu0 %v203
    %1255 = vmatpush.msra.mxu0 %v201
    %1256 = vmatpush.msra.mxu0 %v199
    %1257 = vmatpush.msra.mxu0 %v197
    %1258 = vmatpush.msra.mxu0 %v195
    %1259 = vmatpush.msra.mxu0 %v193
    %1260 = vmatpush.msra.mxu0 %v191
    %1261 = vmatmul.f32.gmra.mxu0 %v1243
    %v1262 = vpop.f32.mrf.mxu0
    %v1263 = vadd.f32 %v142, %v1262
    %1264 = vdwg.mxu0
    %1265 = vmatpush.msra.mxu0 0.0
    %1266 = vmatpush.msra.mxu0 0.0
    %1267 = vmatpush.msra.mxu0 0.0
    %1268 = vmatpush.msra.mxu0 0.0
    %1269 = vmatpush.msra.mxu0 0.0
    %1270 = vmatpush.msra.mxu0 0.0
    %1271 = vmatpush.msra.mxu0 0.0
    %1272 = vmatpush.msra.mxu0 0.0
    %1273 = vmatpush.msra.mxu0 %v206
    %1274 = vmatpush.msra.mxu0 %v204
    %1275 = vmatpush.msra.mxu0 %v202
    %1276 = vmatpush.msra.mxu0 %v200
    %1277 = vmatpush.msra.mxu0 %v198
    %1278 = vmatpush.msra.mxu0 %v196
    %1279 = vmatpush.msra.mxu0 %v194
    %1280 = vmatpush.msra.mxu0 %v192
    %1281 = vmatmul.f32.gmra.mxu0 %v1243
    %v1282 = vpop.f32.mrf.mxu0
    %v1283 = vadd.f32 %v183, %v1282
    %1284 = vdwg.mxu0
    %v1285 = vxor.u32 %v1263, 2147483648
    %v1286 = vxor.u32 %v1283, 2147483648
    %v1287 = vmul.f32 %v1285, 1.442695
    %v1288 = vpow.pop %v1287
    %v1289 = vmul.f32 %v1286, 1.442695
    %v1290 = vpow.pop %v1289
    %v1291 = vadd.f32 %v1288, 1.0
    %v1292 = vadd.f32 %v1290, 1.0
    %v1293 = vrcp.pop %v1291
    %v1294 = vmul.f32 %v1291, %v1293
    %v1295 = vsub.f32 1.0, %v1294
    %v1296 = vmul.f32 %v1293, %v1295
    %v1297 = vadd.f32 %v1293, %v1296
    %vm1298 = vweird.f32 %v1291
    %vm1299 = vweird.f32 %v1293
    %vm1300 = vmor %vm1298, %vm1299
    %v1301 = vsel %vm1300, %v1293, %v1297
    %v1302 = vand.u32 2147483647, %v1291
    %vm1303 = vcmp.eq.f32.partialorder %v1302, 8.507059e+37
    %v1304 = vand.u32 %v1291, 2147483648
    %v1305 = vor.u32 1.1754944e-38, %v1304
    %v1306 = vsel %vm1303, %v1305, %v1301
    %v1307 = vmul.f32 1.0, %v1306
    %v1308 = vrcp.pop %v1292
    %v1309 = vmul.f32 %v1292, %v1308
    %v1310 = vsub.f32 1.0, %v1309
    %v1311 = vmul.f32 %v1308, %v1310
    %v1312 = vadd.f32 %v1308, %v1311
    %vm1313 = vweird.f32 %v1292
    %vm1314 = vweird.f32 %v1308
    %vm1315 = vmor %vm1313, %vm1314
    %v1316 = vsel %vm1315, %v1308, %v1312
    %v1317 = vand.u32 2147483647, %v1292
    %vm1318 = vcmp.eq.f32.partialorder %v1317, 8.507059e+37
    %v1319 = vand.u32 %v1292, 2147483648
    %v1320 = vor.u32 1.1754944e-38, %v1319
    %v1321 = vsel %vm1318, %v1320, %v1316
    %v1322 = vmul.f32 1.0, %v1321
    %v1323 = vtanh.pop %v1283
    %v1324 = vmul.f32 %v1307, %v1134
    %1326 = vrot.lane.b32.xlu0 %v1323, 64
    %v1327 = vpop.permute.xlu0 %1326
    %v1329 = vmul.f32 %v1307, %v1327
    %1331 = vrot.lane.b32.xlu0 %v1329, 64
    %v1332 = vpop.permute.xlu0 %1331
    %v1334 = vadd.f32 %v1324, %v1332
    %v1335 = vtanh.pop %v1334
    %1337 = vrot.lane.b32.xlu0 %v1335, 64
    %v1338 = vpop.permute.xlu0 %1337
    %v1340 = vmul.f32 %v1322, %v1338
    %1342 = vrot.lane.b32.xlu0 %v1241, 64
    %v1343 = vpop.permute.xlu0 %1342
    %v1345 = vsel %vm245, %v1340, %v1343
    %1346 = vmatpush.msra.mxu0 %v237
    %1347 = vmatpush.msra.mxu0 %v235
    %1348 = vmatpush.msra.mxu0 %v233
    %1349 = vmatpush.msra.mxu0 %v231
    %1350 = vmatpush.msra.mxu0 %v229
    %1351 = vmatpush.msra.mxu0 %v227
    %1352 = vmatpush.msra.mxu0 %v225
    %1353 = vmatpush.msra.mxu0 %v223
    %1354 = vmatpush.msra.mxu0 %v221
    %1355 = vmatpush.msra.mxu0 %v219
    %1356 = vmatpush.msra.mxu0 %v217
    %1357 = vmatpush.msra.mxu0 %v215
    %1358 = vmatpush.msra.mxu0 %v213
    %1359 = vmatpush.msra.mxu0 %v211
    %1360 = vmatpush.msra.mxu0 %v209
    %1361 = vmatpush.msra.mxu0 %v207
    %1362 = vmatmul.f32.gmra.mxu0 %v1345
    %v1363 = vpop.f32.mrf.mxu0
    %v1364 = vadd.f32 %v241, %v1363
    %1365 = vdwg.mxu0
    %1366 = vmatpush.msra.mxu0 %v238
    %1367 = vmatpush.msra.mxu0 %v236
    %1368 = vmatpush.msra.mxu0 %v234
    %1369 = vmatpush.msra.mxu0 %v232
    %1370 = vmatpush.msra.mxu0 %v230
    %1371 = vmatpush.msra.mxu0 %v228
    %1372 = vmatpush.msra.mxu0 %v226
    %1373 = vmatpush.msra.mxu0 %v224
    %1374 = vmatpush.msra.mxu0 %v222
    %1375 = vmatpush.msra.mxu0 %v220
    %1376 = vmatpush.msra.mxu0 %v218
    %1377 = vmatpush.msra.mxu0 %v216
    %1378 = vmatpush.msra.mxu0 %v214
    %1379 = vmatpush.msra.mxu0 %v212
    %1380 = vmatpush.msra.mxu0 %v210
    %1381 = vmatpush.msra.mxu0 %v208
    %1382 = vmatmul.f32.gmra.mxu0 %v1345
    %v1383 = vpop.f32.mrf.mxu0
    %v1384 = vadd.f32 %v242, %v1383
    %1385 = vdwg.mxu0
    %v1386 = vxor.u32 %v1364, 2147483648
    %v1387 = vxor.u32 %v1384, 2147483648
    %v1388 = vmul.f32 %v1386, 1.442695
    %v1389 = vpow.pop %v1388
    %v1390 = vmul.f32 %v1387, 1.442695
    %v1391 = vpow.pop %v1390
    %v1392 = vadd.f32 %v1389, 1.0
    %v1393 = vadd.f32 %v1391, 1.0
    %v1394 = vrcp.pop %v1392
    %v1395 = vmul.f32 %v1392, %v1394
    %v1396 = vsub.f32 1.0, %v1395
    %v1397 = vmul.f32 %v1394, %v1396
    %v1398 = vadd.f32 %v1394, %v1397
    %vm1399 = vweird.f32 %v1392
    %vm1400 = vweird.f32 %v1394
    %vm1401 = vmor %vm1399, %vm1400
    %v1402 = vsel %vm1401, %v1394, %v1398
    %v1403 = vand.u32 2147483647, %v1392
    %vm1404 = vcmp.eq.f32.partialorder %v1403, 8.507059e+37
    %v1405 = vand.u32 %v1392, 2147483648
    %v1406 = vor.u32 1.1754944e-38, %v1405
    %v1407 = vsel %vm1404, %v1406, %v1402
    %v1408 = vmul.f32 1.0, %v1407
    %v1409 = vrcp.pop %v1393
    %v1410 = vmul.f32 %v1393, %v1409
    %v1411 = vsub.f32 1.0, %v1410
    %v1412 = vmul.f32 %v1409, %v1411
    %v1413 = vadd.f32 %v1409, %v1412
    %vm1414 = vweird.f32 %v1393
    %vm1415 = vweird.f32 %v1409
    %vm1416 = vmor %vm1414, %vm1415
    %v1417 = vsel %vm1416, %v1409, %v1413
    %v1418 = vand.u32 2147483647, %v1393
    %vm1419 = vcmp.eq.f32.partialorder %v1418, 8.507059e+37
    %v1420 = vand.u32 %v1393, 2147483648
    %v1421 = vor.u32 1.1754944e-38, %v1420
    %v1422 = vsel %vm1419, %v1421, %v1417
    %v1423 = vmul.f32 1.0, %v1422
    %v1424 = vtanh.pop %v1384
    %v1425 = vmul.f32 %v1408, %v1235
    %1427 = vrot.lane.b32.xlu0 %v1424, 64
    %v1428 = vpop.permute.xlu0 %1427
    %v1430 = vmul.f32 %v1408, %v1428
    %1432 = vrot.lane.b32.xlu0 %v1430, 64
    %v1433 = vpop.permute.xlu0 %1432
    %v1435 = vadd.f32 %v1425, %v1433
    %v1436 = vtanh.pop %v1435
    %1438 = vrot.lane.b32.xlu0 %v1436, 64
    %v1439 = vpop.permute.xlu0 %1438
    %v1441 = vmul.f32 %v1423, %v1439
    %v1443 = vsel %vm245, %v1340, 0
    %1445 = vmatpush.msra.mxu0 0.0
    %1446 = vmatpush.msra.mxu0 0.0
    %1447 = vmatpush.msra.mxu0 0.0
    %1448 = vmatpush.msra.mxu0 0.0
    %1449 = vmatpush.msra.mxu0 0.0
    %1450 = vmatpush.msra.mxu0 0.0
    %1451 = vmatpush.msra.mxu0 0.0
    %1452 = vmatpush.msra.mxu0 0.0
    %1453 = vmatpush.msra.mxu0 %v205
    %1454 = vmatpush.msra.mxu0 %v203
    %1455 = vmatpush.msra.mxu0 %v201
    %1456 = vmatpush.msra.mxu0 %v199
    %1457 = vmatpush.msra.mxu0 %v197
    %1458 = vmatpush.msra.mxu0 %v195
    %1459 = vmatpush.msra.mxu0 %v193
    %1460 = vmatpush.msra.mxu0 %v191
    %1461 = vmatmul.f32.gmra.mxu0 %v1443
    %v1462 = vpop.f32.mrf.mxu0
    %v1463 = vadd.f32 %v145, %v1462
    %1464 = vdwg.mxu0
    %1465 = vmatpush.msra.mxu0 0.0
    %1466 = vmatpush.msra.mxu0 0.0
    %1467 = vmatpush.msra.mxu0 0.0
    %1468 = vmatpush.msra.mxu0 0.0
    %1469 = vmatpush.msra.mxu0 0.0
    %1470 = vmatpush.msra.mxu0 0.0
    %1471 = vmatpush.msra.mxu0 0.0
    %1472 = vmatpush.msra.mxu0 0.0
    %1473 = vmatpush.msra.mxu0 %v206
    %1474 = vmatpush.msra.mxu0 %v204
    %1475 = vmatpush.msra.mxu0 %v202
    %1476 = vmatpush.msra.mxu0 %v200
    %1477 = vmatpush.msra.mxu0 %v198
    %1478 = vmatpush.msra.mxu0 %v196
    %1479 = vmatpush.msra.mxu0 %v194
    %1480 = vmatpush.msra.mxu0 %v192
    %1481 = vmatmul.f32.gmra.mxu0 %v1443
    %v1482 = vpop.f32.mrf.mxu0
    %v1483 = vadd.f32 %v186, %v1482
    %1484 = vdwg.mxu0
    %v1485 = vxor.u32 %v1463, 2147483648
    %v1486 = vxor.u32 %v1483, 2147483648
    %v1487 = vmul.f32 %v1485, 1.442695
    %v1488 = vpow.pop %v1487
    %v1489 = vmul.f32 %v1486, 1.442695
    %v1490 = vpow.pop %v1489
    %v1491 = vadd.f32 %v1488, 1.0
    %v1492 = vadd.f32 %v1490, 1.0
    %v1493 = vrcp.pop %v1491
    %v1494 = vmul.f32 %v1491, %v1493
    %v1495 = vsub.f32 1.0, %v1494
    %v1496 = vmul.f32 %v1493, %v1495
    %v1497 = vadd.f32 %v1493, %v1496
    %vm1498 = vweird.f32 %v1491
    %vm1499 = vweird.f32 %v1493
    %vm1500 = vmor %vm1498, %vm1499
    %v1501 = vsel %vm1500, %v1493, %v1497
    %v1502 = vand.u32 2147483647, %v1491
    %vm1503 = vcmp.eq.f32.partialorder %v1502, 8.507059e+37
    %v1504 = vand.u32 %v1491, 2147483648
    %v1505 = vor.u32 1.1754944e-38, %v1504
    %v1506 = vsel %vm1503, %v1505, %v1501
    %v1507 = vmul.f32 1.0, %v1506
    %v1508 = vrcp.pop %v1492
    %v1509 = vmul.f32 %v1492, %v1508
    %v1510 = vsub.f32 1.0, %v1509
    %v1511 = vmul.f32 %v1508, %v1510
    %v1512 = vadd.f32 %v1508, %v1511
    %vm1513 = vweird.f32 %v1492
    %vm1514 = vweird.f32 %v1508
    %vm1515 = vmor %vm1513, %vm1514
    %v1516 = vsel %vm1515, %v1508, %v1512
    %v1517 = vand.u32 2147483647, %v1492
    %vm1518 = vcmp.eq.f32.partialorder %v1517, 8.507059e+37
    %v1519 = vand.u32 %v1492, 2147483648
    %v1520 = vor.u32 1.1754944e-38, %v1519
    %v1521 = vsel %vm1518, %v1520, %v1516
    %v1522 = vmul.f32 1.0, %v1521
    %v1523 = vtanh.pop %v1483
    %v1524 = vmul.f32 %v1507, %v1334
    %1526 = vrot.lane.b32.xlu0 %v1523, 64
    %v1527 = vpop.permute.xlu0 %1526
    %v1529 = vmul.f32 %v1507, %v1527
    %1531 = vrot.lane.b32.xlu0 %v1529, 64
    %v1532 = vpop.permute.xlu0 %1531
    %v1534 = vadd.f32 %v1524, %v1532
    %v1535 = vtanh.pop %v1534
    %1537 = vrot.lane.b32.xlu0 %v1535, 64
    %v1538 = vpop.permute.xlu0 %1537
    %v1540 = vmul.f32 %v1522, %v1538
    %1542 = vrot.lane.b32.xlu0 %v1441, 64
    %v1543 = vpop.permute.xlu0 %1542
    %v1545 = vsel %vm245, %v1540, %v1543
    %1546 = vmatpush.msra.mxu0 %v237
    %1547 = vmatpush.msra.mxu0 %v235
    %1548 = vmatpush.msra.mxu0 %v233
    %1549 = vmatpush.msra.mxu0 %v231
    %1550 = vmatpush.msra.mxu0 %v229
    %1551 = vmatpush.msra.mxu0 %v227
    %1552 = vmatpush.msra.mxu0 %v225
    %1553 = vmatpush.msra.mxu0 %v223
    %1554 = vmatpush.msra.mxu0 %v221
    %1555 = vmatpush.msra.mxu0 %v219
    %1556 = vmatpush.msra.mxu0 %v217
    %1557 = vmatpush.msra.mxu0 %v215
    %1558 = vmatpush.msra.mxu0 %v213
    %1559 = vmatpush.msra.mxu0 %v211
    %1560 = vmatpush.msra.mxu0 %v209
    %1561 = vmatpush.msra.mxu0 %v207
    %1562 = vmatmul.f32.gmra.mxu0 %v1545
    %v1563 = vpop.f32.mrf.mxu0
    %v1564 = vadd.f32 %v241, %v1563
    %1565 = vdwg.mxu0
    %1566 = vmatpush.msra.mxu0 %v238
    %1567 = vmatpush.msra.mxu0 %v236
    %1568 = vmatpush.msra.mxu0 %v234
    %1569 = vmatpush.msra.mxu0 %v232
    %1570 = vmatpush.msra.mxu0 %v230
    %1571 = vmatpush.msra.mxu0 %v228
    %1572 = vmatpush.msra.mxu0 %v226
    %1573 = vmatpush.msra.mxu0 %v224
    %1574 = vmatpush.msra.mxu0 %v222
    %1575 = vmatpush.msra.mxu0 %v220
    %1576 = vmatpush.msra.mxu0 %v218
    %1577 = vmatpush.msra.mxu0 %v216
    %1578 = vmatpush.msra.mxu0 %v214
    %1579 = vmatpush.msra.mxu0 %v212
    %1580 = vmatpush.msra.mxu0 %v210
    %1581 = vmatpush.msra.mxu0 %v208
    %1582 = vmatmul.f32.gmra.mxu0 %v1545
    %v1583 = vpop.f32.mrf.mxu0
    %v1584 = vadd.f32 %v242, %v1583
    %1585 = vdwg.mxu0
    %v1586 = vxor.u32 %v1564, 2147483648
    %v1587 = vxor.u32 %v1584, 2147483648
    %v1588 = vmul.f32 %v1586, 1.442695
    %v1589 = vpow.pop %v1588
    %v1590 = vmul.f32 %v1587, 1.442695
    %v1591 = vpow.pop %v1590
    %v1592 = vadd.f32 %v1589, 1.0
    %v1593 = vadd.f32 %v1591, 1.0
    %v1594 = vrcp.pop %v1592
    %v1595 = vmul.f32 %v1592, %v1594
    %v1596 = vsub.f32 1.0, %v1595
    %v1597 = vmul.f32 %v1594, %v1596
    %v1598 = vadd.f32 %v1594, %v1597
    %vm1599 = vweird.f32 %v1592
    %vm1600 = vweird.f32 %v1594
    %vm1601 = vmor %vm1599, %vm1600
    %v1602 = vsel %vm1601, %v1594, %v1598
    %v1603 = vand.u32 2147483647, %v1592
    %vm1604 = vcmp.eq.f32.partialorder %v1603, 8.507059e+37
    %v1605 = vand.u32 %v1592, 2147483648
    %v1606 = vor.u32 1.1754944e-38, %v1605
    %v1607 = vsel %vm1604, %v1606, %v1602
    %v1608 = vmul.f32 1.0, %v1607
    %v1609 = vrcp.pop %v1593
    %v1610 = vmul.f32 %v1593, %v1609
    %v1611 = vsub.f32 1.0, %v1610
    %v1612 = vmul.f32 %v1609, %v1611
    %v1613 = vadd.f32 %v1609, %v1612
    %vm1614 = vweird.f32 %v1593
    %vm1615 = vweird.f32 %v1609
    %vm1616 = vmor %vm1614, %vm1615
    %v1617 = vsel %vm1616, %v1609, %v1613
    %v1618 = vand.u32 2147483647, %v1593
    %vm1619 = vcmp.eq.f32.partialorder %v1618, 8.507059e+37
    %v1620 = vand.u32 %v1593, 2147483648
    %v1621 = vor.u32 1.1754944e-38, %v1620
    %v1622 = vsel %vm1619, %v1621, %v1617
    %v1623 = vmul.f32 1.0, %v1622
    %v1624 = vtanh.pop %v1584
    %v1625 = vmul.f32 %v1608, %v1435
    %1627 = vrot.lane.b32.xlu0 %v1624, 64
    %v1628 = vpop.permute.xlu0 %1627
    %v1630 = vmul.f32 %v1608, %v1628
    %1632 = vrot.lane.b32.xlu0 %v1630, 64
    %v1633 = vpop.permute.xlu0 %1632
    %v1635 = vadd.f32 %v1625, %v1633
    %v1636 = vtanh.pop %v1635
    %1638 = vrot.lane.b32.xlu0 %v1636, 64
    %v1639 = vpop.permute.xlu0 %1638
    %v1641 = vmul.f32 %v1623, %v1639
    %v1643 = vsel %vm245, %v1540, 0
    %1645 = vmatpush.msra.mxu0 0.0
    %1646 = vmatpush.msra.mxu0 0.0
    %1647 = vmatpush.msra.mxu0 0.0
    %1648 = vmatpush.msra.mxu0 0.0
    %1649 = vmatpush.msra.mxu0 0.0
    %1650 = vmatpush.msra.mxu0 0.0
    %1651 = vmatpush.msra.mxu0 0.0
    %1652 = vmatpush.msra.mxu0 0.0
    %1653 = vmatpush.msra.mxu0 %v205
    %1654 = vmatpush.msra.mxu0 %v203
    %1655 = vmatpush.msra.mxu0 %v201
    %1656 = vmatpush.msra.mxu0 %v199
    %1657 = vmatpush.msra.mxu0 %v197
    %1658 = vmatpush.msra.mxu0 %v195
    %1659 = vmatpush.msra.mxu0 %v193
    %1660 = vmatpush.msra.mxu0 %v191
    %1661 = vmatmul.f32.gmra.mxu0 %v1643
    %v1662 = vpop.f32.mrf.mxu0
    %v1663 = vadd.f32 %v148, %v1662
    %1664 = vdwg.mxu0
    %1665 = vmatpush.msra.mxu0 0.0
    %1666 = vmatpush.msra.mxu0 0.0
    %1667 = vmatpush.msra.mxu0 0.0
    %1668 = vmatpush.msra.mxu0 0.0
    %1669 = vmatpush.msra.mxu0 0.0
    %1670 = vmatpush.msra.mxu0 0.0
    %1671 = vmatpush.msra.mxu0 0.0
    %1672 = vmatpush.msra.mxu0 0.0
    %1673 = vmatpush.msra.mxu0 %v206
    %1674 = vmatpush.msra.mxu0 %v204
    %1675 = vmatpush.msra.mxu0 %v202
    %1676 = vmatpush.msra.mxu0 %v200
    %1677 = vmatpush.msra.mxu0 %v198
    %1678 = vmatpush.msra.mxu0 %v196
    %1679 = vmatpush.msra.mxu0 %v194
    %1680 = vmatpush.msra.mxu0 %v192
    %1681 = vmatmul.f32.gmra.mxu0 %v1643
    %v1682 = vpop.f32.mrf.mxu0
    %v1683 = vadd.f32 %v189, %v1682
    %1684 = vdwg.mxu0
    %v1685 = vxor.u32 %v1663, 2147483648
    %v1686 = vxor.u32 %v1683, 2147483648
    %v1687 = vmul.f32 %v1685, 1.442695
    %v1688 = vpow.pop %v1687
    %v1689 = vmul.f32 %v1686, 1.442695
    %v1690 = vpow.pop %v1689
    %v1691 = vadd.f32 %v1688, 1.0
    %v1692 = vadd.f32 %v1690, 1.0
    %v1693 = vrcp.pop %v1691
    %v1694 = vmul.f32 %v1691, %v1693
    %v1695 = vsub.f32 1.0, %v1694
    %v1696 = vmul.f32 %v1693, %v1695
    %v1697 = vadd.f32 %v1693, %v1696
    %vm1698 = vweird.f32 %v1691
    %vm1699 = vweird.f32 %v1693
    %vm1700 = vmor %vm1698, %vm1699
    %v1701 = vsel %vm1700, %v1693, %v1697
    %v1702 = vand.u32 2147483647, %v1691
    %vm1703 = vcmp.eq.f32.partialorder %v1702, 8.507059e+37
    %v1704 = vand.u32 %v1691, 2147483648
    %v1705 = vor.u32 1.1754944e-38, %v1704
    %v1706 = vsel %vm1703, %v1705, %v1701
    %v1707 = vmul.f32 1.0, %v1706
    %v1708 = vrcp.pop %v1692
    %v1709 = vmul.f32 %v1692, %v1708
    %v1710 = vsub.f32 1.0, %v1709
    %v1711 = vmul.f32 %v1708, %v1710
    %v1712 = vadd.f32 %v1708, %v1711
    %vm1713 = vweird.f32 %v1692
    %vm1714 = vweird.f32 %v1708
    %vm1715 = vmor %vm1713, %vm1714
    %v1716 = vsel %vm1715, %v1708, %v1712
    %v1717 = vand.u32 2147483647, %v1692
    %vm1718 = vcmp.eq.f32.partialorder %v1717, 8.507059e+37
    %v1719 = vand.u32 %v1692, 2147483648
    %v1720 = vor.u32 1.1754944e-38, %v1719
    %v1721 = vsel %vm1718, %v1720, %v1716
    %v1722 = vmul.f32 1.0, %v1721
    %v1723 = vtanh.pop %v1683
    %v1724 = vmul.f32 %v1707, %v1534
    %1726 = vrot.lane.b32.xlu0 %v1723, 64
    %v1727 = vpop.permute.xlu0 %1726
    %v1729 = vmul.f32 %v1707, %v1727
    %1731 = vrot.lane.b32.xlu0 %v1729, 64
    %v1732 = vpop.permute.xlu0 %1731
    %v1734 = vadd.f32 %v1724, %v1732
    %v1735 = vtanh.pop %v1734
    %1737 = vrot.lane.b32.xlu0 %v1735, 64
    %v1738 = vpop.permute.xlu0 %1737
    %v1740 = vmul.f32 %v1722, %v1738
    %1742 = vrot.lane.b32.xlu0 %v1641, 64
    %v1743 = vpop.permute.xlu0 %1742
    %v1745 = vsel %vm245, %v1740, %v1743
    %1746 = vmatpush.msra.mxu0 %v237
    %1747 = vmatpush.msra.mxu0 %v235
    %1748 = vmatpush.msra.mxu0 %v233
    %1749 = vmatpush.msra.mxu0 %v231
    %1750 = vmatpush.msra.mxu0 %v229
    %1751 = vmatpush.msra.mxu0 %v227
    %1752 = vmatpush.msra.mxu0 %v225
    %1753 = vmatpush.msra.mxu0 %v223
    %1754 = vmatpush.msra.mxu0 %v221
    %1755 = vmatpush.msra.mxu0 %v219
    %1756 = vmatpush.msra.mxu0 %v217
    %1757 = vmatpush.msra.mxu0 %v215
    %1758 = vmatpush.msra.mxu0 %v213
    %1759 = vmatpush.msra.mxu0 %v211
    %1760 = vmatpush.msra.mxu0 %v209
    %1761 = vmatpush.msra.mxu0 %v207
    %1762 = vmatmul.f32.gmra.mxu0 %v1745
    %v1763 = vpop.f32.mrf.mxu0
    %v1764 = vadd.f32 %v241, %v1763
    %1765 = vdwg.mxu0
    %1766 = vmatpush.msra.mxu0 %v238
    %1767 = vmatpush.msra.mxu0 %v236
    %1768 = vmatpush.msra.mxu0 %v234
    %1769 = vmatpush.msra.mxu0 %v232
    %1770 = vmatpush.msra.mxu0 %v230
    %1771 = vmatpush.msra.mxu0 %v228
    %1772 = vmatpush.msra.mxu0 %v226
    %1773 = vmatpush.msra.mxu0 %v224
    %1774 = vmatpush.msra.mxu0 %v222
    %1775 = vmatpush.msra.mxu0 %v220
    %1776 = vmatpush.msra.mxu0 %v218
    %1777 = vmatpush.msra.mxu0 %v216
    %1778 = vmatpush.msra.mxu0 %v214
    %1779 = vmatpush.msra.mxu0 %v212
    %1780 = vmatpush.msra.mxu0 %v210
    %1781 = vmatpush.msra.mxu0 %v208
    %1782 = vmatmul.f32.gmra.mxu0 %v1745
    %v1783 = vpop.f32.mrf.mxu0
    %v1784 = vadd.f32 %v242, %v1783
    %1785 = vdwg.mxu0
    %v1786 = vxor.u32 %v1764, 2147483648
    %v1787 = vxor.u32 %v1784, 2147483648
    %v1788 = vmul.f32 %v1786, 1.442695
    %v1789 = vpow.pop %v1788
    %v1790 = vmul.f32 %v1787, 1.442695
    %v1791 = vpow.pop %v1790
    %v1792 = vadd.f32 %v1789, 1.0
    %v1793 = vadd.f32 %v1791, 1.0
    %v1794 = vrcp.pop %v1792
    %v1795 = vmul.f32 %v1792, %v1794
    %v1796 = vsub.f32 1.0, %v1795
    %v1797 = vmul.f32 %v1794, %v1796
    %v1798 = vadd.f32 %v1794, %v1797
    %vm1799 = vweird.f32 %v1792
    %vm1800 = vweird.f32 %v1794
    %vm1801 = vmor %vm1799, %vm1800
    %v1802 = vsel %vm1801, %v1794, %v1798
    %v1803 = vand.u32 2147483647, %v1792
    %vm1804 = vcmp.eq.f32.partialorder %v1803, 8.507059e+37
    %v1805 = vand.u32 %v1792, 2147483648
    %v1806 = vor.u32 1.1754944e-38, %v1805
    %v1807 = vsel %vm1804, %v1806, %v1802
    %v1808 = vmul.f32 1.0, %v1807
    %v1809 = vrcp.pop %v1793
    %v1810 = vmul.f32 %v1793, %v1809
    %v1811 = vsub.f32 1.0, %v1810
    %v1812 = vmul.f32 %v1809, %v1811
    %v1813 = vadd.f32 %v1809, %v1812
    %vm1814 = vweird.f32 %v1793
    %vm1815 = vweird.f32 %v1809
    %vm1816 = vmor %vm1814, %vm1815
    %v1817 = vsel %vm1816, %v1809, %v1813
    %v1818 = vand.u32 2147483647, %v1793
    %vm1819 = vcmp.eq.f32.partialorder %v1818, 8.507059e+37
    %v1820 = vand.u32 %v1793, 2147483648
    %v1821 = vor.u32 1.1754944e-38, %v1820
    %v1822 = vsel %vm1819, %v1821, %v1817
    %v1823 = vmul.f32 1.0, %v1822
    %v1824 = vtanh.pop %v1784
    %v1825 = vmul.f32 %v1808, %v1635
    %1827 = vrot.lane.b32.xlu0 %v1824, 64
    %v1828 = vpop.permute.xlu0 %1827
    %v1830 = vmul.f32 %v1808, %v1828
    %1832 = vrot.lane.b32.xlu0 %v1830, 64
    %v1833 = vpop.permute.xlu0 %1832
    %v1835 = vadd.f32 %v1825, %v1833
    %v1836 = vtanh.pop %v1835
    %1838 = vrot.lane.b32.xlu0 %v1836, 64
    %v1839 = vpop.permute.xlu0 %1838
    %v1841 = vmul.f32 %v1823, %v1839
    %v1842 = vld [vmem:[%s6] sm:$0xff]
    %v1843 = vld [vmem:[%s6 + $0x8] sm:$0xff]
    %v1844 = vld [vmem:[%s6 + $0x10] sm:$0xff]
    %v1845 = vld [vmem:[%s6 + $0x18] sm:$0xff]
    %v1846 = vld [vmem:[%s6 + $0x20] sm:$0xff]
    %v1847 = vld [vmem:[%s6 + $0x28] sm:$0xff]
    %v1848 = vld [vmem:[%s6 + $0x30] sm:$0xff]
    %v1849 = vld [vmem:[%s6 + $0x38] sm:$0xff]
    %v1850 = vld [vmem:[#allocation2] sm:$0x1]
    %v1852 = vperm.slane %v1850, 0
    %v1855 = vsel %vm245, %v1841, 0
    %1857 = vmatpush.msra.mxu0 0.0
    %1858 = vmatpush.msra.mxu0 0.0
    %1859 = vmatpush.msra.mxu0 0.0
    %1860 = vmatpush.msra.mxu0 0.0
    %1861 = vmatpush.msra.mxu0 0.0
    %1862 = vmatpush.msra.mxu0 0.0
    %1863 = vmatpush.msra.mxu0 0.0
    %1864 = vmatpush.msra.mxu0 0.0
    %1865 = vmatpush.msra.mxu0 %v1849
    %1866 = vmatpush.msra.mxu0 %v1848
    %1867 = vmatpush.msra.mxu0 %v1847
    %1868 = vmatpush.msra.mxu0 %v1846
    %1869 = vmatpush.msra.mxu0 %v1845
    %1870 = vmatpush.msra.mxu0 %v1844
    %1871 = vmatpush.msra.mxu0 %v1843
    %1872 = vmatpush.msra.mxu0 %v1842
    %1873 = vmatmul.f32.gmra.mxu0 %v1855
    %v1874 = vpop.f32.mrf.mxu0
    %v1875 = vadd.f32 %v1852, %v1874
    %1876 = vdwg.mxu0
    %vm1877 = vcmask 7168
    %1878 = vst.msk [vmem:[%s8] sm:$0xff] %vm1877, %v1875
    // Predicated region
    $region42: #{tpu_custom_call.1} parent=1 // pred_check
      _
    $region43: #{tpu_custom_call.1} parent=1 // pred_check_branch
      %1880 = sbr.rel (0) target = $region45
    $region44: #{tpu_custom_call.1} parent=1 // pred_region
      _
    $region45: #{tpu_custom_call.1} parent=1 // pred_fallthru
      _
    // Predicated region
    $region46: #{tpu_custom_call.1} parent=1 // pred_check
      _
    $region47: #{tpu_custom_call.1} parent=1 // pred_check_branch
      %1882 = sbr.rel (0) target = $region49
    $region48: #{tpu_custom_call.1} parent=1 // pred_region
      _
    $region49: #{tpu_custom_call.1} parent=1 // pred_fallthru
      _
    %1883 = vsyncpa [#allocation4], 1
    %1884 = vsyncpa [#allocation6], 1

</llo_original>
